<compile_context>
chip_gen: v7x
topology: tpu7x:2x2x1
jax: 0.10.0
libtpu: 0.0.40
codegen_flags: <defaults>
</compile_context>

<pallas_src>
import functools

import jax
import jax.numpy as jnp
from jax.experimental import pallas as pl
from jax.experimental.pallas import tpu as pltpu

NEG_SLOPE = 0.01          # PyTorch LeakyReLU default
BN_EPS = 1e-5             # PyTorch BatchNorm2d default
_VMEM_LIMIT = 48 * 1024 * 1024
_POOL_BLOCK_BUDGET = 6 * 1024 * 1024


def _leaky(x):
    return jnp.where(x > 0, x, NEG_SLOPE * x)


def _round_up(x, m):
    return (x + m - 1) // m * m


# ---------------------------------------------------------------------------
# Kernel 1: conv-as-GEMM with fused (BN-folded) bias + LeakyReLU epilogue.
#   out[co, m] = leaky( sum_k W[co, k] * P[k, m] + bias[co] )
# W already carries the folded BatchNorm scale; operands are bf16, acc is f32.
# ---------------------------------------------------------------------------
def _gemm_bias_act_kernel(w_ref, p_ref, b_ref, o_ref, *, act):
    acc = jnp.dot(w_ref[...], p_ref[...], preferred_element_type=jnp.float32)
    acc = acc + b_ref[...]                      # (Cout_p, 1) broadcast over lanes
    if act:
        acc = _leaky(acc)
    o_ref[...] = acc.astype(o_ref.dtype)


def _conv_gemm(w2, bias, patches, *, act):
    """w2: (Cout, K) f32, bias: (Cout,) f32, patches: (K, M) bf16 -> (Cout, M) f32."""
    cout, k = w2.shape
    _, m = patches.shape
    cout_p = _round_up(cout, 8)
    k_p = _round_up(k, 8)
    tm = min(512, _round_up(m, 128))            # lane-dense M tile
    m_pad = _round_up(m, tm)

    w_p = jnp.zeros((cout_p, k_p), jnp.float32).at[:cout, :k].set(w2)
    w_p = w_p.astype(jnp.bfloat16)
    b_p = jnp.zeros((cout_p, 1), jnp.float32).at[:cout, 0].set(bias)
    p_p = jnp.pad(patches, ((0, k_p - k), (0, m_pad - m)))

    cost = pl.CostEstimate(
        flops=2 * cout_p * k_p * m_pad,
        transcendentals=0,
        bytes_accessed=cout_p * k_p * 2 + k_p * m_pad * 2
        + cout_p * 4 + cout_p * m_pad * 4)

    out = pl.pallas_call(
        functools.partial(_gemm_bias_act_kernel, act=act),
        out_shape=jax.ShapeDtypeStruct((cout_p, m_pad), jnp.float32),
        grid=(m_pad // tm,),
        in_specs=[
            pl.BlockSpec((cout_p, k_p), lambda i: (0, 0)),   # weights (resident)
            pl.BlockSpec((k_p, tm), lambda i: (0, i)),       # patch tile
            pl.BlockSpec((cout_p, 1), lambda i: (0, 0)),     # bias   (resident)
        ],
        out_specs=pl.BlockSpec((cout_p, tm), lambda i: (0, i)),
        compiler_params=pltpu.CompilerParams(
            dimension_semantics=("parallel",),
            vmem_limit_bytes=_VMEM_LIMIT),
        cost_estimate=cost,
    )(w_p, p_p, b_p)
    return out[:cout, :m]


def conv2d(x_c, w, *, stride, padding, scale=None, bias=None, act=True):
    """Conv2d on CNHW input: x_c (Cin,N,H,W) -> (Cout,N,OH,OW).

    `scale` (per out-channel, from inference BatchNorm) is folded into the
    weights at trace time; `bias` + LeakyReLU are fused into the GEMM epilogue.
    """
    cout, cin, kh, kw = w.shape
    c, n, h, wdt = x_c.shape
    assert c == cin
    # im2col in CNHW layout -> (Cin*kh*kw, N*OH*OW), huge dim last (lane-dense).
    # TODO(synk): fuse this gather into the GEMM kernel (manual-DMA halo
    # handling) for the overlapping full-resolution 3x3 convs; it still pays a
    # kh*kw-amplified HBM round trip for those two layers.
    xp = jnp.pad(x_c.astype(jnp.bfloat16),
                 ((0, 0), (0, 0), (padding, padding), (padding, padding)))
    oh = (h + 2 * padding - kh) // stride + 1
    ow = (wdt + 2 * padding - kw) // stride + 1
    taps = []
    for i in range(kh):
        for j in range(kw):
            taps.append(xp[:, :, i:i + stride * (oh - 1) + 1:stride,
                              j:j + stride * (ow - 1) + 1:stride])
    patches = jnp.stack(taps, axis=1)                    # (Cin, kh*kw, N, OH, OW)
    patches = patches.reshape(cin * kh * kw, n * oh * ow)

    w2 = w.reshape(cout, cin * kh * kw)
    if scale is not None:                                # fold BN scale into W
        w2 = w2 * scale[:, None]
    if bias is None:
        bias = jnp.zeros((cout,), jnp.float32)
    out = _conv_gemm(w2, bias, patches, act=act)
    return out.reshape(cout, n, oh, ow)


# ---------------------------------------------------------------------------
# Kernel 2: windowed reduction (max / mean) over a phase-split input.
#   phases: (NP, CN, Hs, Ws);  out[cn,u,v] = op over taps (p,di,dj) of
#   phases[p, cn, u+di, v+dj].  All in-kernel slices are unit-stride.
# ---------------------------------------------------------------------------
def _window_reduce_kernel(ph_ref, o_ref, *, taps, op):
    x = ph_ref[...]                                      # (NP, tcn, Hs, Ws)
    oh, ow = o_ref.shape[1], o_ref.shape[2]
    acc = None
    for (p, di, dj) in taps:
        v = x[p, :, di:di + oh, dj:dj + ow]
        if acc is None:
            acc = v
        elif op == "max":
            acc = jnp.maximum(acc, v)
        else:
            acc = acc + v
    if op == "mean":
        acc = acc * (1.0 / len(taps))
    o_ref[...] = acc.astype(o_ref.dtype)


def _window_reduce(phases, taps, op, oh, ow):
    np_, cn, hs, ws = phases.shape
    per_cn = np_ * hs * ws * 4
    tcn = max(1, min(cn, _POOL_BLOCK_BUDGET // max(per_cn, 1)))
    cn_pad = _round_up(cn, tcn)
    if cn_pad != cn:
        phases = jnp.pad(phases, ((0, 0), (0, cn_pad - cn), (0, 0), (0, 0)))
    out = pl.pallas_call(
        functools.partial(_window_reduce_kernel, taps=tuple(taps), op=op),
        out_shape=jax.ShapeDtypeStruct((cn_pad, oh, ow), jnp.float32),
        grid=(cn_pad // tcn,),
        in_specs=[pl.BlockSpec((np_, tcn, hs, ws), lambda c: (0, c, 0, 0))],
        out_specs=pl.BlockSpec((tcn, oh, ow), lambda c: (c, 0, 0)),
        compiler_params=pltpu.CompilerParams(
            dimension_semantics=("parallel",),
            vmem_limit_bytes=_VMEM_LIMIT),
    )(phases)
    return out[:cn]


def maxpool2d(x_c, k, stride, padding):
    """MaxPool2d(k, stride=2, padding) on CNHW input (stride fixed to 2)."""
    assert stride == 2
    c, n, h, w = x_c.shape
    oh = (h + 2 * padding - k) // 2 + 1
    ow = (w + 2 * padding - k) // 2 + 1
    xp = jnp.pad(x_c, ((0, 0), (0, 0), (padding, padding), (padding, padding)),
                 constant_values=-jnp.inf)
    hs, ws = (h + 2 * padding) // 2, (w + 2 * padding) // 2
    # phase split (one ~1x HBM pass): phases[2*pi+pj, cn, u, v] = xp[.., 2u+pi, 2v+pj]
    ph = xp.reshape(c, n, hs, 2, ws, 2).transpose(3, 5, 0, 1, 2, 4)
    ph = ph.reshape(4, c * n, hs, ws)
    taps = [((i % 2) * 2 + (j % 2), i // 2, j // 2)
            for i in range(k) for j in range(k)]
    out = _window_reduce(ph, taps, "max", oh, ow)
    return out.reshape(c, n, oh, ow)


def bilinear_down6(x_c):
    """F.interpolate(x, (H//6, W//6), mode='bilinear'), H, W divisible by 6.

    align_corners=False -> src = 6*o + 2.5, an exact 0.5/0.5 blend of offsets
    2 and 3 inside each 6x6 tile.
    """
    c, n, h, w = x_c.shape
    oh, ow = h // 6, w // 6
    ph = jnp.stack([x_c[:, :, di:di + 6 * (oh - 1) + 1:6,
                            dj:dj + 6 * (ow - 1) + 1:6]
                    for di in (2, 3) for dj in (2, 3)], axis=0)
    ph = ph.reshape(4, c * n, oh, ow)
    taps = [(t, 0, 0) for t in range(4)]
    out = _window_reduce(ph, taps, "mean", oh, ow)
    return out.reshape(c, n, oh, ow)


# ------------------------------ parameters ----------------------------------

def _bn_fold(gamma, beta, mean, var):
    scale = gamma / jnp.sqrt(var + BN_EPS)
    return scale, beta - mean * scale


def init_params(key, in_channels, out_channels):
    bc = out_channels // 4
    ks = jax.random.split(key, 7)

    def w(k, shape):
        fan_in = shape[1] * shape[2] * shape[3]
        return jax.random.normal(k, shape, jnp.float32) / jnp.sqrt(fan_in)

    def bn(c, o):
        r = jnp.arange(c, dtype=jnp.float32)
        return {"gamma": 1.0 + 0.05 * r + o, "beta": 0.02 * r - o,
                "mean": 0.01 * r, "var": 1.0 + 0.03 * r}

    return {
        "b00_conv0_w": w(ks[0], (4, in_channels, 3, 3)),
        "b00_bn": bn(4, 0.01),
        "b00_conv1_w": w(ks[1], (bc, 4, 3, 3)),
        "b00_conv1_b": 0.01 * jnp.arange(bc, dtype=jnp.float32),
        "b02_conv_w": w(ks[2], (2 * bc, 2 * bc, 3, 3)),
        "b1_conv_w": w(ks[3], (bc, in_channels, 7, 7)),
        "b2_conv0_w": w(ks[4], (4, in_channels, 4, 4)),
        "b2_conv0_b": 0.02 * jnp.arange(4, dtype=jnp.float32),
        "b2_conv1_w": w(ks[5], (bc, 4, 3, 3)),
        "norm_bn1": bn(out_channels, 0.0),
        "norm_conv_w": w(ks[6], (out_channels, out_channels, 3, 3)),
        "norm_bn2": bn(out_channels, 0.02),
    }


# -------------------------------- forward -----------------------------------

def multi_branch_stem_m12x(params, x):
    """x: (N, Cin, H, W), H and W divisible by 12 -> (N, out_C, H/12, W/12)."""
    n, cin, h, w = x.shape
    assert h % 12 == 0 and w % 12 == 0, "H, W must be divisible by 12"
    out_c = params["norm_conv_w"].shape[0]
    bc = out_c // 4

    # folded BatchNorm affines (inference / running-stat semantics)
    s_bn0, b_bn0 = _bn_fold(**params["b00_bn"])
    s_n1, b_n1 = _bn_fold(**params["norm_bn1"])
    s_n2, b_n2 = _bn_fold(**params["norm_bn2"])

    # module boundary: NCHW -> CNHW (channels leading, spatial lane-dense)
    x_c = jnp.transpose(x, (1, 0, 2, 3))

    # shared bilinear /6 downsample
    down = bilinear_down6(x_c)                                   # (Cin,N,H/6,W/6)

    # --- branch0_0: conv3 s2 p1 (+BN+leaky) -> conv3 s1 p1 (+bias+leaky*) ---
    # (*) branch0_2's LeakyReLU hoisted here (monotone -> commutes with MaxPool)
    h0 = conv2d(x_c, params["b00_conv0_w"], stride=2, padding=1,
                scale=s_bn0, bias=b_bn0, act=True)               # (4,N,H/2,W/2)
    x0 = conv2d(h0, params["b00_conv1_w"], stride=1, padding=1,
                bias=params["b00_conv1_b"], act=True)            # (bc,N,H/2,W/2)

    # --- branch0_1: two maxpools + channel concat ---
    p0 = maxpool2d(x0, 3, 2, 1)                                  # (bc,N,H/4,W/4)
    p1 = maxpool2d(x0, 5, 2, 2)                                  # (bc,N,H/4,W/4)
    xcat = jnp.concatenate([p0, p1], axis=0)                     # (2bc,N,H/4,W/4)

    # --- branch0_2: conv3 s3 p0; norm-BN1[:2bc] + leaky folded into epilogue ---
    x0f = conv2d(xcat, params["b02_conv_w"], stride=3, padding=0,
                 scale=s_n1[:2 * bc], bias=b_n1[:2 * bc], act=True)

    # --- branch1: conv7 s2 p3 on the /6 downsample; norm-BN1[2bc:3bc] folded ---
    x1 = conv2d(down, params["b1_conv_w"], stride=2, padding=3,
                scale=s_n1[2 * bc:3 * bc], bias=b_n1[2 * bc:3 * bc], act=True)

    # --- branch2: conv4 s4 (+bias+leaky) -> conv3 s3; norm-BN1[3bc:] folded ---
    h2 = conv2d(x_c, params["b2_conv0_w"], stride=4, padding=0,
                bias=params["b2_conv0_b"], act=True)             # (4,N,H/4,W/4)
    x2 = conv2d(h2, params["b2_conv1_w"], stride=3, padding=0,
                scale=s_n1[3 * bc:], bias=b_n1[3 * bc:], act=True)

    # channel concat (leading axis); norm BN1 + leaky already applied per branch
    y = jnp.concatenate([x0f, x1, x2], axis=0)                   # (out_c,N,H/12,W/12)

    # --- norm conv 3x3 s1 p1 with BN2 folded into weights + leaky epilogue ---
    y = conv2d(y, params["norm_conv_w"], stride=1, padding=1,
               scale=s_n2, bias=b_n2, act=True)

    return jnp.transpose(y, (1, 0, 2, 3))                        # back to NCHW


# ---------------------------------- main -------------------------------------

if __name__ == "__main__":
    key = jax.random.PRNGKey(0)
    k_x, k_p = jax.random.split(key)

    N, CIN, H, W = 2, 4, 24, 24       # spatial divisible by 12
    OUT_CHANNELS = 16                 # branch_channels = 4

    x = jax.random.normal(k_x, (N, CIN, H, W), jnp.float32)
    params = init_params(k_p, CIN, OUT_CHANNELS)

    y = jax.jit(multi_branch_stem_m12x)(params, x)
    y = jax.block_until_ready(y)

    assert y.shape == (N, OUT_CHANNELS, H // 12, W // 12), y.shape
    assert bool(jnp.all(jnp.isfinite(y)))
    print("KERNEL_OK")
</pallas_src>

<mosaic_0001>
module attributes {stable_mosaic.version = 11 : i64} {
  func.func @_gemm_bias_act_kernel(%arg0: i32, %arg1: memref<8x40xbf16, #tpu.memory_space<vmem>>, %arg2: memref<40x384xbf16, #tpu.memory_space<vmem>>, %arg3: memref<8x1xf32, #tpu.memory_space<vmem>>, %arg4: memref<8x384xf32, #tpu.memory_space<vmem>>) attributes {dimension_semantics = [#tpu.dimension_semantics<parallel>], iteration_bounds = array<i64: 1>, scalar_prefetch = 0 : i64, scratch_operands = 0 : i64, tpu.core_type = #tpu.core_type<tc>, window_params = [{pipeline_mode = #tpu.pipeline_mode<synchronous>, transform_indices = @transform_0, window_bounds = array<i64: 8, 40>}, {transform_indices = @transform_1, window_bounds = array<i64: 40, 384>}, {pipeline_mode = #tpu.pipeline_mode<synchronous>, transform_indices = @transform_2, window_bounds = array<i64: 8, 1>}, {transform_indices = @transform_3, window_bounds = array<i64: 8, 384>}]} {
    %c0 = arith.constant 0 : index
    %c0_0 = arith.constant 0 : index
    %0 = vector.load %arg1[%c0, %c0_0] : memref<8x40xbf16, #tpu.memory_space<vmem>>, vector<8x40xbf16>
    %c0_1 = arith.constant 0 : index
    %c0_2 = arith.constant 0 : index
    %1 = vector.load %arg2[%c0_1, %c0_2] : memref<40x384xbf16, #tpu.memory_space<vmem>>, vector<40x384xbf16>
    %cst = arith.constant dense<0.000000e+00> : vector<8x384xf32>
    %2 = tpu.matmul %0, %1, %cst {dimension_numbers = #tpu.dot_dimension_numbers<[1], [0], [0], [1], [0, 0, 1, 1], [], []>} : vector<8x40xbf16>, vector<40x384xbf16>, vector<8x384xf32> -> vector<8x384xf32>
    %c0_3 = arith.constant 0 : index
    %c0_4 = arith.constant 0 : index
    %3 = vector.load %arg3[%c0_3, %c0_4] : memref<8x1xf32, #tpu.memory_space<vmem>>, vector<8x1xf32>
    %4 = vector.broadcast %3 : vector<8x1xf32> to vector<8x384xf32>
    %5 = arith.addf %2, %4 : vector<8x384xf32>
    %cst_5 = arith.constant 0.000000e+00 : f32
    %6 = vector.broadcast %cst_5 : f32 to vector<8x384xf32>
    %7 = arith.cmpf ogt, %5, %6 : vector<8x384xf32>
    %cst_6 = arith.constant 0.00999999977 : f32
    %8 = vector.broadcast %cst_6 : f32 to vector<8x384xf32>
    %9 = arith.mulf %8, %5 : vector<8x384xf32>
    %10 = arith.select %7, %5, %9 : vector<8x384xi1>, vector<8x384xf32>
    %c0_7 = arith.constant 0 : index
    %c0_8 = arith.constant 0 : index
    %11 = vector.load %arg4[%c0_7, %c0_8] : memref<8x384xf32, #tpu.memory_space<vmem>>, vector<8x384xf32>
    tpu.vector_store %arg4[%c0_7, %c0_8], %10 {strides = array<i32>} : memref<8x384xf32, #tpu.memory_space<vmem>>, vector<8x384xf32>,
    return
  }
  func.func @transform_0(%arg0: i32) -> (i32, i32) {
    %c0_i32 = arith.constant 0 : i32
    %c0_i32_0 = arith.constant 0 : i32
    %c0_i32_1 = arith.constant 0 : i32
    return %c0_i32, %c0_i32_0 : i32, i32
  }
  func.func @transform_1(%arg0: i32) -> (i32, i32) {
    %c0_i32 = arith.constant 0 : i32
    %c0_i32_0 = arith.constant 0 : i32
    return %c0_i32, %arg0 : i32, i32
  }
  func.func @transform_2(%arg0: i32) -> (i32, i32) {
    %c0_i32 = arith.constant 0 : i32
    %c0_i32_0 = arith.constant 0 : i32
    %c0_i32_1 = arith.constant 0 : i32
    return %c0_i32, %c0_i32_0 : i32, i32
  }
  func.func @transform_3(%arg0: i32) -> (i32, i32) {
    %c0_i32 = arith.constant 0 : i32
    %c0_i32_0 = arith.constant 0 : i32
    return %c0_i32, %arg0 : i32, i32
  }
}

module attributes {stable_mosaic.version = 11 : i64} {
  func.func @_window_reduce_kernel(%arg0: i32, %arg1: memref<4x8x8x8xf32, #tpu.memory_space<vmem>>, %arg2: memref<8x6x6xf32, #tpu.memory_space<vmem>>) attributes {dimension_semantics = [#tpu.dimension_semantics<parallel>], iteration_bounds = array<i64: 1>, scalar_prefetch = 0 : i64, scratch_operands = 0 : i64, tpu.core_type = #tpu.core_type<tc>, window_params = [{transform_indices = @transform_0, window_bounds = array<i64: 4, 8, 8, 8>}, {transform_indices = @transform_1, window_bounds = array<i64: 8, 6, 6>}]} {
    %c0 = arith.constant 0 : index
    %c0_0 = arith.constant 0 : index
    %c0_1 = arith.constant 0 : index
    %c0_2 = arith.constant 0 : index
    %0 = vector.load %arg1[%c0, %c0_0, %c0_1, %c0_2] : memref<4x8x8x8xf32, #tpu.memory_space<vmem>>, vector<4x8x8x8xf32>
    %1 = vector.extract_strided_slice %0 {offsets = [0, 0, 0, 0], sizes = [1, 8, 6, 6], strides = [1, 1, 1, 1]} : vector<4x8x8x8xf32> to vector<1x8x6x6xf32>
    %2 = vector.shape_cast %1 : vector<1x8x6x6xf32> to vector<8x6x6xf32>
    %3 = vector.extract_strided_slice %0 {offsets = [1, 0, 0, 0], sizes = [1, 8, 6, 6], strides = [1, 1, 1, 1]} : vector<4x8x8x8xf32> to vector<1x8x6x6xf32>
    %4 = vector.shape_cast %3 : vector<1x8x6x6xf32> to vector<8x6x6xf32>
    %5 = arith.maximumf %2, %4 : vector<8x6x6xf32>
    %6 = vector.extract_strided_slice %0 {offsets = [0, 0, 0, 1], sizes = [1, 8, 6, 6], strides = [1, 1, 1, 1]} : vector<4x8x8x8xf32> to vector<1x8x6x6xf32>
    %7 = vector.shape_cast %6 : vector<1x8x6x6xf32> to vector<8x6x6xf32>
    %8 = arith.maximumf %5, %7 : vector<8x6x6xf32>
    %9 = vector.extract_strided_slice %0 {offsets = [1, 0, 0, 1], sizes = [1, 8, 6, 6], strides = [1, 1, 1, 1]} : vector<4x8x8x8xf32> to vector<1x8x6x6xf32>
    %10 = vector.shape_cast %9 : vector<1x8x6x6xf32> to vector<8x6x6xf32>
    %11 = arith.maximumf %8, %10 : vector<8x6x6xf32>
    %12 = vector.extract_strided_slice %0 {offsets = [0, 0, 0, 2], sizes = [1, 8, 6, 6], strides = [1, 1, 1, 1]} : vector<4x8x8x8xf32> to vector<1x8x6x6xf32>
    %13 = vector.shape_cast %12 : vector<1x8x6x6xf32> to vector<8x6x6xf32>
    %14 = arith.maximumf %11, %13 : vector<8x6x6xf32>
    %15 = vector.extract_strided_slice %0 {offsets = [2, 0, 0, 0], sizes = [1, 8, 6, 6], strides = [1, 1, 1, 1]} : vector<4x8x8x8xf32> to vector<1x8x6x6xf32>
    %16 = vector.shape_cast %15 : vector<1x8x6x6xf32> to vector<8x6x6xf32>
    %17 = arith.maximumf %14, %16 : vector<8x6x6xf32>
    %18 = vector.extract_strided_slice %0 {offsets = [3, 0, 0, 0], sizes = [1, 8, 6, 6], strides = [1, 1, 1, 1]} : vector<4x8x8x8xf32> to vector<1x8x6x6xf32>
    %19 = vector.shape_cast %18 : vector<1x8x6x6xf32> to vector<8x6x6xf32>
    %20 = arith.maximumf %17, %19 : vector<8x6x6xf32>
    %21 = vector.extract_strided_slice %0 {offsets = [2, 0, 0, 1], sizes = [1, 8, 6, 6], strides = [1, 1, 1, 1]} : vector<4x8x8x8xf32> to vector<1x8x6x6xf32>
    %22 = vector.shape_cast %21 : vector<1x8x6x6xf32> to vector<8x6x6xf32>
    %23 = arith.maximumf %20, %22 : vector<8x6x6xf32>
    %24 = vector.extract_strided_slice %0 {offsets = [3, 0, 0, 1], sizes = [1, 8, 6, 6], strides = [1, 1, 1, 1]} : vector<4x8x8x8xf32> to vector<1x8x6x6xf32>
    %25 = vector.shape_cast %24 : vector<1x8x6x6xf32> to vector<8x6x6xf32>
    %26 = arith.maximumf %23, %25 : vector<8x6x6xf32>
    %27 = vector.extract_strided_slice %0 {offsets = [2, 0, 0, 2], sizes = [1, 8, 6, 6], strides = [1, 1, 1, 1]} : vector<4x8x8x8xf32> to vector<1x8x6x6xf32>
    %28 = vector.shape_cast %27 : vector<1x8x6x6xf32> to vector<8x6x6xf32>
    %29 = arith.maximumf %26, %28 : vector<8x6x6xf32>
    %30 = vector.extract_strided_slice %0 {offsets = [0, 0, 1, 0], sizes = [1, 8, 6, 6], strides = [1, 1, 1, 1]} : vector<4x8x8x8xf32> to vector<1x8x6x6xf32>
    %31 = vector.shape_cast %30 : vector<1x8x6x6xf32> to vector<8x6x6xf32>
    %32 = arith.maximumf %29, %31 : vector<8x6x6xf32>
    %33 = vector.extract_strided_slice %0 {offsets = [1, 0, 1, 0], sizes = [1, 8, 6, 6], strides = [1, 1, 1, 1]} : vector<4x8x8x8xf32> to vector<1x8x6x6xf32>
    %34 = vector.shape_cast %33 : vector<1x8x6x6xf32> to vector<8x6x6xf32>
    %35 = arith.maximumf %32, %34 : vector<8x6x6xf32>
    %36 = vector.extract_strided_slice %0 {offsets = [0, 0, 1, 1], sizes = [1, 8, 6, 6], strides = [1, 1, 1, 1]} : vector<4x8x8x8xf32> to vector<1x8x6x6xf32>
    %37 = vector.shape_cast %36 : vector<1x8x6x6xf32> to vector<8x6x6xf32>
    %38 = arith.maximumf %35, %37 : vector<8x6x6xf32>
    %39 = vector.extract_strided_slice %0 {offsets = [1, 0, 1, 1], sizes = [1, 8, 6, 6], strides = [1, 1, 1, 1]} : vector<4x8x8x8xf32> to vector<1x8x6x6xf32>
    %40 = vector.shape_cast %39 : vector<1x8x6x6xf32> to vector<8x6x6xf32>
    %41 = arith.maximumf %38, %40 : vector<8x6x6xf32>
    %42 = vector.extract_strided_slice %0 {offsets = [0, 0, 1, 2], sizes = [1, 8, 6, 6], strides = [1, 1, 1, 1]} : vector<4x8x8x8xf32> to vector<1x8x6x6xf32>
    %43 = vector.shape_cast %42 : vector<1x8x6x6xf32> to vector<8x6x6xf32>
    %44 = arith.maximumf %41, %43 : vector<8x6x6xf32>
    %45 = vector.extract_strided_slice %0 {offsets = [2, 0, 1, 0], sizes = [1, 8, 6, 6], strides = [1, 1, 1, 1]} : vector<4x8x8x8xf32> to vector<1x8x6x6xf32>
    %46 = vector.shape_cast %45 : vector<1x8x6x6xf32> to vector<8x6x6xf32>
    %47 = arith.maximumf %44, %46 : vector<8x6x6xf32>
    %48 = vector.extract_strided_slice %0 {offsets = [3, 0, 1, 0], sizes = [1, 8, 6, 6], strides = [1, 1, 1, 1]} : vector<4x8x8x8xf32> to vector<1x8x6x6xf32>
    %49 = vector.shape_cast %48 : vector<1x8x6x6xf32> to vector<8x6x6xf32>
    %50 = arith.maximumf %47, %49 : vector<8x6x6xf32>
    %51 = vector.extract_strided_slice %0 {offsets = [2, 0, 1, 1], sizes = [1, 8, 6, 6], strides = [1, 1, 1, 1]} : vector<4x8x8x8xf32> to vector<1x8x6x6xf32>
    %52 = vector.shape_cast %51 : vector<1x8x6x6xf32> to vector<8x6x6xf32>
    %53 = arith.maximumf %50, %52 : vector<8x6x6xf32>
    %54 = vector.extract_strided_slice %0 {offsets = [3, 0, 1, 1], sizes = [1, 8, 6, 6], strides = [1, 1, 1, 1]} : vector<4x8x8x8xf32> to vector<1x8x6x6xf32>
    %55 = vector.shape_cast %54 : vector<1x8x6x6xf32> to vector<8x6x6xf32>
    %56 = arith.maximumf %53, %55 : vector<8x6x6xf32>
    %57 = vector.extract_strided_slice %0 {offsets = [2, 0, 1, 2], sizes = [1, 8, 6, 6], strides = [1, 1, 1, 1]} : vector<4x8x8x8xf32> to vector<1x8x6x6xf32>
    %58 = vector.shape_cast %57 : vector<1x8x6x6xf32> to vector<8x6x6xf32>
    %59 = arith.maximumf %56, %58 : vector<8x6x6xf32>
    %60 = vector.extract_strided_slice %0 {offsets = [0, 0, 2, 0], sizes = [1, 8, 6, 6], strides = [1, 1, 1, 1]} : vector<4x8x8x8xf32> to vector<1x8x6x6xf32>
    %61 = vector.shape_cast %60 : vector<1x8x6x6xf32> to vector<8x6x6xf32>
    %62 = arith.maximumf %59, %61 : vector<8x6x6xf32>
    %63 = vector.extract_strided_slice %0 {offsets = [1, 0, 2, 0], sizes = [1, 8, 6, 6], strides = [1, 1, 1, 1]} : vector<4x8x8x8xf32> to vector<1x8x6x6xf32>
    %64 = vector.shape_cast %63 : vector<1x8x6x6xf32> to vector<8x6x6xf32>
    %65 = arith.maximumf %62, %64 : vector<8x6x6xf32>
    %66 = vector.extract_strided_slice %0 {offsets = [0, 0, 2, 1], sizes = [1, 8, 6, 6], strides = [1, 1, 1, 1]} : vector<4x8x8x8xf32> to vector<1x8x6x6xf32>
    %67 = vector.shape_cast %66 : vector<1x8x6x6xf32> to vector<8x6x6xf32>
    %68 = arith.maximumf %65, %67 : vector<8x6x6xf32>
    %69 = vector.extract_strided_slice %0 {offsets = [1, 0, 2, 1], sizes = [1, 8, 6, 6], strides = [1, 1, 1, 1]} : vector<4x8x8x8xf32> to vector<1x8x6x6xf32>
    %70 = vector.shape_cast %69 : vector<1x8x6x6xf32> to vector<8x6x6xf32>
    %71 = arith.maximumf %68, %70 : vector<8x6x6xf32>
    %72 = vector.extract_strided_slice %0 {offsets = [0, 0, 2, 2], sizes = [1, 8, 6, 6], strides = [1, 1, 1, 1]} : vector<4x8x8x8xf32> to vector<1x8x6x6xf32>
    %73 = vector.shape_cast %72 : vector<1x8x6x6xf32> to vector<8x6x6xf32>
    %74 = arith.maximumf %71, %73 : vector<8x6x6xf32>
    %c0_3 = arith.constant 0 : index
    %c0_4 = arith.constant 0 : index
    %c0_5 = arith.constant 0 : index
    %75 = vector.load %arg2[%c0_3, %c0_4, %c0_5] : memref<8x6x6xf32, #tpu.memory_space<vmem>>, vector<8x6x6xf32>
    tpu.vector_store %arg2[%c0_3, %c0_4, %c0_5], %74 {strides = array<i32>} : memref<8x6x6xf32, #tpu.memory_space<vmem>>, vector<8x6x6xf32>,
    return
  }
  func.func @transform_0(%arg0: i32) -> (i32, i32, i32, i32) {
    %c0_i32 = arith.constant 0 : i32
    %c0_i32_0 = arith.constant 0 : i32
    %c0_i32_1 = arith.constant 0 : i32
    %c0_i32_2 = arith.constant 0 : i32
    return %c0_i32, %arg0, %c0_i32_0, %c0_i32_1 : i32, i32, i32, i32
  }
  func.func @transform_1(%arg0: i32) -> (i32, i32, i32) {
    %c0_i32 = arith.constant 0 : i32
    %c0_i32_0 = arith.constant 0 : i32
    %c0_i32_1 = arith.constant 0 : i32
    return %arg0, %c0_i32, %c0_i32_0 : i32, i32, i32
  }
}

module attributes {stable_mosaic.version = 11 : i64} {
  func.func @_window_reduce_kernel(%arg0: i32, %arg1: memref<4x8x7x7xf32, #tpu.memory_space<vmem>>, %arg2: memref<8x6x6xf32, #tpu.memory_space<vmem>>) attributes {dimension_semantics = [#tpu.dimension_semantics<parallel>], iteration_bounds = array<i64: 1>, scalar_prefetch = 0 : i64, scratch_operands = 0 : i64, tpu.core_type = #tpu.core_type<tc>, window_params = [{transform_indices = @transform_0, window_bounds = array<i64: 4, 8, 7, 7>}, {transform_indices = @transform_1, window_bounds = array<i64: 8, 6, 6>}]} {
    %c0 = arith.constant 0 : index
    %c0_0 = arith.constant 0 : index
    %c0_1 = arith.constant 0 : index
    %c0_2 = arith.constant 0 : index
    %0 = vector.load %arg1[%c0, %c0_0, %c0_1, %c0_2] : memref<4x8x7x7xf32, #tpu.memory_space<vmem>>, vector<4x8x7x7xf32>
    %1 = vector.extract_strided_slice %0 {offsets = [0, 0, 0, 0], sizes = [1, 8, 6, 6], strides = [1, 1, 1, 1]} : vector<4x8x7x7xf32> to vector<1x8x6x6xf32>
    %2 = vector.shape_cast %1 : vector<1x8x6x6xf32> to vector<8x6x6xf32>
    %3 = vector.extract_strided_slice %0 {offsets = [1, 0, 0, 0], sizes = [1, 8, 6, 6], strides = [1, 1, 1, 1]} : vector<4x8x7x7xf32> to vector<1x8x6x6xf32>
    %4 = vector.shape_cast %3 : vector<1x8x6x6xf32> to vector<8x6x6xf32>
    %5 = arith.maximumf %2, %4 : vector<8x6x6xf32>
    %6 = vector.extract_strided_slice %0 {offsets = [0, 0, 0, 1], sizes = [1, 8, 6, 6], strides = [1, 1, 1, 1]} : vector<4x8x7x7xf32> to vector<1x8x6x6xf32>
    %7 = vector.shape_cast %6 : vector<1x8x6x6xf32> to vector<8x6x6xf32>
    %8 = arith.maximumf %5, %7 : vector<8x6x6xf32>
    %9 = vector.extract_strided_slice %0 {offsets = [2, 0, 0, 0], sizes = [1, 8, 6, 6], strides = [1, 1, 1, 1]} : vector<4x8x7x7xf32> to vector<1x8x6x6xf32>
    %10 = vector.shape_cast %9 : vector<1x8x6x6xf32> to vector<8x6x6xf32>
    %11 = arith.maximumf %8, %10 : vector<8x6x6xf32>
    %12 = vector.extract_strided_slice %0 {offsets = [3, 0, 0, 0], sizes = [1, 8, 6, 6], strides = [1, 1, 1, 1]} : vector<4x8x7x7xf32> to vector<1x8x6x6xf32>
    %13 = vector.shape_cast %12 : vector<1x8x6x6xf32> to vector<8x6x6xf32>
    %14 = arith.maximumf %11, %13 : vector<8x6x6xf32>
    %15 = vector.extract_strided_slice %0 {offsets = [2, 0, 0, 1], sizes = [1, 8, 6, 6], strides = [1, 1, 1, 1]} : vector<4x8x7x7xf32> to vector<1x8x6x6xf32>
    %16 = vector.shape_cast %15 : vector<1x8x6x6xf32> to vector<8x6x6xf32>
    %17 = arith.maximumf %14, %16 : vector<8x6x6xf32>
    %18 = vector.extract_strided_slice %0 {offsets = [0, 0, 1, 0], sizes = [1, 8, 6, 6], strides = [1, 1, 1, 1]} : vector<4x8x7x7xf32> to vector<1x8x6x6xf32>
    %19 = vector.shape_cast %18 : vector<1x8x6x6xf32> to vector<8x6x6xf32>
    %20 = arith.maximumf %17, %19 : vector<8x6x6xf32>
    %21 = vector.extract_strided_slice %0 {offsets = [1, 0, 1, 0], sizes = [1, 8, 6, 6], strides = [1, 1, 1, 1]} : vector<4x8x7x7xf32> to vector<1x8x6x6xf32>
    %22 = vector.shape_cast %21 : vector<1x8x6x6xf32> to vector<8x6x6xf32>
    %23 = arith.maximumf %20, %22 : vector<8x6x6xf32>
    %24 = vector.extract_strided_slice %0 {offsets = [0, 0, 1, 1], sizes = [1, 8, 6, 6], strides = [1, 1, 1, 1]} : vector<4x8x7x7xf32> to vector<1x8x6x6xf32>
    %25 = vector.shape_cast %24 : vector<1x8x6x6xf32> to vector<8x6x6xf32>
    %26 = arith.maximumf %23, %25 : vector<8x6x6xf32>
    %c0_3 = arith.constant 0 : index
    %c0_4 = arith.constant 0 : index
    %c0_5 = arith.constant 0 : index
    %27 = vector.load %arg2[%c0_3, %c0_4, %c0_5] : memref<8x6x6xf32, #tpu.memory_space<vmem>>, vector<8x6x6xf32>
    tpu.vector_store %arg2[%c0_3, %c0_4, %c0_5], %26 {strides = array<i32>} : memref<8x6x6xf32, #tpu.memory_space<vmem>>, vector<8x6x6xf32>,
    return
  }
  func.func @transform_0(%arg0: i32) -> (i32, i32, i32, i32) {
    %c0_i32 = arith.constant 0 : i32
    %c0_i32_0 = arith.constant 0 : i32
    %c0_i32_1 = arith.constant 0 : i32
    %c0_i32_2 = arith.constant 0 : i32
    return %c0_i32, %arg0, %c0_i32_0, %c0_i32_1 : i32, i32, i32, i32
  }
  func.func @transform_1(%arg0: i32) -> (i32, i32, i32) {
    %c0_i32 = arith.constant 0 : i32
    %c0_i32_0 = arith.constant 0 : i32
    %c0_i32_1 = arith.constant 0 : i32
    return %arg0, %c0_i32, %c0_i32_0 : i32, i32, i32
  }
}

module attributes {stable_mosaic.version = 11 : i64} {
  func.func @_gemm_bias_act_kernel(%arg0: i32, %arg1: memref<8x72xbf16, #tpu.memory_space<vmem>>, %arg2: memref<72x128xbf16, #tpu.memory_space<vmem>>, %arg3: memref<8x1xf32, #tpu.memory_space<vmem>>, %arg4: memref<8x128xf32, #tpu.memory_space<vmem>>) attributes {dimension_semantics = [#tpu.dimension_semantics<parallel>], iteration_bounds = array<i64: 1>, scalar_prefetch = 0 : i64, scratch_operands = 0 : i64, tpu.core_type = #tpu.core_type<tc>, window_params = [{pipeline_mode = #tpu.pipeline_mode<synchronous>, transform_indices = @transform_0, window_bounds = array<i64: 8, 72>}, {transform_indices = @transform_1, window_bounds = array<i64: 72, 128>}, {pipeline_mode = #tpu.pipeline_mode<synchronous>, transform_indices = @transform_2, window_bounds = array<i64: 8, 1>}, {transform_indices = @transform_3, window_bounds = array<i64: 8, 128>}]} {
    %c0 = arith.constant 0 : index
    %c0_0 = arith.constant 0 : index
    %0 = vector.load %arg1[%c0, %c0_0] : memref<8x72xbf16, #tpu.memory_space<vmem>>, vector<8x72xbf16>
    %c0_1 = arith.constant 0 : index
    %c0_2 = arith.constant 0 : index
    %1 = vector.load %arg2[%c0_1, %c0_2] : memref<72x128xbf16, #tpu.memory_space<vmem>>, vector<72x128xbf16>
    %cst = arith.constant dense<0.000000e+00> : vector<8x128xf32>
    %2 = tpu.matmul %0, %1, %cst {dimension_numbers = #tpu.dot_dimension_numbers<[1], [0], [0], [1], [0, 0, 1, 1], [], []>} : vector<8x72xbf16>, vector<72x128xbf16>, vector<8x128xf32> -> vector<8x128xf32>
    %c0_3 = arith.constant 0 : index
    %c0_4 = arith.constant 0 : index
    %3 = vector.load %arg3[%c0_3, %c0_4] : memref<8x1xf32, #tpu.memory_space<vmem>>, vector<8x1xf32>
    %4 = vector.broadcast %3 : vector<8x1xf32> to vector<8x128xf32>
    %5 = arith.addf %2, %4 : vector<8x128xf32>
    %cst_5 = arith.constant 0.000000e+00 : f32
    %6 = vector.broadcast %cst_5 : f32 to vector<8x128xf32>
    %7 = arith.cmpf ogt, %5, %6 : vector<8x128xf32>
    %cst_6 = arith.constant 0.00999999977 : f32
    %8 = vector.broadcast %cst_6 : f32 to vector<8x128xf32>
    %9 = arith.mulf %8, %5 : vector<8x128xf32>
    %10 = arith.select %7, %5, %9 : vector<8x128xi1>, vector<8x128xf32>
    %c0_7 = arith.constant 0 : index
    %c0_8 = arith.constant 0 : index
    %11 = vector.load %arg4[%c0_7, %c0_8] : memref<8x128xf32, #tpu.memory_space<vmem>>, vector<8x128xf32>
    tpu.vector_store %arg4[%c0_7, %c0_8], %10 {strides = array<i32>} : memref<8x128xf32, #tpu.memory_space<vmem>>, vector<8x128xf32>,
    return
  }
  func.func @transform_0(%arg0: i32) -> (i32, i32) {
    %c0_i32 = arith.constant 0 : i32
    %c0_i32_0 = arith.constant 0 : i32
    %c0_i32_1 = arith.constant 0 : i32
    return %c0_i32, %c0_i32_0 : i32, i32
  }
  func.func @transform_1(%arg0: i32) -> (i32, i32) {
    %c0_i32 = arith.constant 0 : i32
    %c0_i32_0 = arith.constant 0 : i32
    return %c0_i32, %arg0 : i32, i32
  }
  func.func @transform_2(%arg0: i32) -> (i32, i32) {
    %c0_i32 = arith.constant 0 : i32
    %c0_i32_0 = arith.constant 0 : i32
    %c0_i32_1 = arith.constant 0 : i32
    return %c0_i32, %c0_i32_0 : i32, i32
  }
  func.func @transform_3(%arg0: i32) -> (i32, i32) {
    %c0_i32 = arith.constant 0 : i32
    %c0_i32_0 = arith.constant 0 : i32
    return %c0_i32, %arg0 : i32, i32
  }
}

module attributes {stable_mosaic.version = 11 : i64} {
  func.func @_window_reduce_kernel(%arg0: i32, %arg1: memref<4x8x4x4xf32, #tpu.memory_space<vmem>>, %arg2: memref<8x4x4xf32, #tpu.memory_space<vmem>>) attributes {dimension_semantics = [#tpu.dimension_semantics<parallel>], iteration_bounds = array<i64: 1>, scalar_prefetch = 0 : i64, scratch_operands = 0 : i64, tpu.core_type = #tpu.core_type<tc>, window_params = [{transform_indices = @transform_0, window_bounds = array<i64: 4, 8, 4, 4>}, {transform_indices = @transform_1, window_bounds = array<i64: 8, 4, 4>}]} {
    %c0 = arith.constant 0 : index
    %c0_0 = arith.constant 0 : index
    %c0_1 = arith.constant 0 : index
    %c0_2 = arith.constant 0 : index
    %0 = vector.load %arg1[%c0, %c0_0, %c0_1, %c0_2] : memref<4x8x4x4xf32, #tpu.memory_space<vmem>>, vector<4x8x4x4xf32>
    %1 = vector.extract_strided_slice %0 {offsets = [0, 0, 0, 0], sizes = [1, 8, 4, 4], strides = [1, 1, 1, 1]} : vector<4x8x4x4xf32> to vector<1x8x4x4xf32>
    %2 = vector.shape_cast %1 : vector<1x8x4x4xf32> to vector<8x4x4xf32>
    %3 = vector.extract_strided_slice %0 {offsets = [1, 0, 0, 0], sizes = [1, 8, 4, 4], strides = [1, 1, 1, 1]} : vector<4x8x4x4xf32> to vector<1x8x4x4xf32>
    %4 = vector.shape_cast %3 : vector<1x8x4x4xf32> to vector<8x4x4xf32>
    %5 = arith.addf %2, %4 : vector<8x4x4xf32>
    %6 = vector.extract_strided_slice %0 {offsets = [2, 0, 0, 0], sizes = [1, 8, 4, 4], strides = [1, 1, 1, 1]} : vector<4x8x4x4xf32> to vector<1x8x4x4xf32>
    %7 = vector.shape_cast %6 : vector<1x8x4x4xf32> to vector<8x4x4xf32>
    %8 = arith.addf %5, %7 : vector<8x4x4xf32>
    %9 = vector.extract_strided_slice %0 {offsets = [3, 0, 0, 0], sizes = [1, 8, 4, 4], strides = [1, 1, 1, 1]} : vector<4x8x4x4xf32> to vector<1x8x4x4xf32>
    %10 = vector.shape_cast %9 : vector<1x8x4x4xf32> to vector<8x4x4xf32>
    %11 = arith.addf %8, %10 : vector<8x4x4xf32>
    %cst = arith.constant 2.500000e-01 : f32
    %12 = vector.broadcast %cst : f32 to vector<8x4x4xf32>
    %13 = arith.mulf %11, %12 : vector<8x4x4xf32>
    %c0_3 = arith.constant 0 : index
    %c0_4 = arith.constant 0 : index
    %c0_5 = arith.constant 0 : index
    %14 = vector.load %arg2[%c0_3, %c0_4, %c0_5] : memref<8x4x4xf32, #tpu.memory_space<vmem>>, vector<8x4x4xf32>
    tpu.vector_store %arg2[%c0_3, %c0_4, %c0_5], %13 {strides = array<i32>} : memref<8x4x4xf32, #tpu.memory_space<vmem>>, vector<8x4x4xf32>,
    return
  }
  func.func @transform_0(%arg0: i32) -> (i32, i32, i32, i32) {
    %c0_i32 = arith.constant 0 : i32
    %c0_i32_0 = arith.constant 0 : i32
    %c0_i32_1 = arith.constant 0 : i32
    %c0_i32_2 = arith.constant 0 : i32
    return %c0_i32, %arg0, %c0_i32_0, %c0_i32_1 : i32, i32, i32, i32
  }
  func.func @transform_1(%arg0: i32) -> (i32, i32, i32) {
    %c0_i32 = arith.constant 0 : i32
    %c0_i32_0 = arith.constant 0 : i32
    %c0_i32_1 = arith.constant 0 : i32
    return %arg0, %c0_i32, %c0_i32_0 : i32, i32, i32
  }
}

module attributes {stable_mosaic.version = 11 : i64} {
  func.func @_gemm_bias_act_kernel(%arg0: i32, %arg1: memref<8x200xbf16, #tpu.memory_space<vmem>>, %arg2: memref<200x128xbf16, #tpu.memory_space<vmem>>, %arg3: memref<8x1xf32, #tpu.memory_space<vmem>>, %arg4: memref<8x128xf32, #tpu.memory_space<vmem>>) attributes {dimension_semantics = [#tpu.dimension_semantics<parallel>], iteration_bounds = array<i64: 1>, scalar_prefetch = 0 : i64, scratch_operands = 0 : i64, tpu.core_type = #tpu.core_type<tc>, window_params = [{pipeline_mode = #tpu.pipeline_mode<synchronous>, transform_indices = @transform_0, window_bounds = array<i64: 8, 200>}, {transform_indices = @transform_1, window_bounds = array<i64: 200, 128>}, {pipeline_mode = #tpu.pipeline_mode<synchronous>, transform_indices = @transform_2, window_bounds = array<i64: 8, 1>}, {transform_indices = @transform_3, window_bounds = array<i64: 8, 128>}]} {
    %c0 = arith.constant 0 : index
    %c0_0 = arith.constant 0 : index
    %0 = vector.load %arg1[%c0, %c0_0] : memref<8x200xbf16, #tpu.memory_space<vmem>>, vector<8x200xbf16>
    %c0_1 = arith.constant 0 : index
    %c0_2 = arith.constant 0 : index
    %1 = vector.load %arg2[%c0_1, %c0_2] : memref<200x128xbf16, #tpu.memory_space<vmem>>, vector<200x128xbf16>
    %cst = arith.constant dense<0.000000e+00> : vector<8x128xf32>
    %2 = tpu.matmul %0, %1, %cst {dimension_numbers = #tpu.dot_dimension_numbers<[1], [0], [0], [1], [0, 0, 1, 1], [], []>} : vector<8x200xbf16>, vector<200x128xbf16>, vector<8x128xf32> -> vector<8x128xf32>
    %c0_3 = arith.constant 0 : index
    %c0_4 = arith.constant 0 : index
    %3 = vector.load %arg3[%c0_3, %c0_4] : memref<8x1xf32, #tpu.memory_space<vmem>>, vector<8x1xf32>
    %4 = vector.broadcast %3 : vector<8x1xf32> to vector<8x128xf32>
    %5 = arith.addf %2, %4 : vector<8x128xf32>
    %cst_5 = arith.constant 0.000000e+00 : f32
    %6 = vector.broadcast %cst_5 : f32 to vector<8x128xf32>
    %7 = arith.cmpf ogt, %5, %6 : vector<8x128xf32>
    %cst_6 = arith.constant 0.00999999977 : f32
    %8 = vector.broadcast %cst_6 : f32 to vector<8x128xf32>
    %9 = arith.mulf %8, %5 : vector<8x128xf32>
    %10 = arith.select %7, %5, %9 : vector<8x128xi1>, vector<8x128xf32>
    %c0_7 = arith.constant 0 : index
    %c0_8 = arith.constant 0 : index
    %11 = vector.load %arg4[%c0_7, %c0_8] : memref<8x128xf32, #tpu.memory_space<vmem>>, vector<8x128xf32>
    tpu.vector_store %arg4[%c0_7, %c0_8], %10 {strides = array<i32>} : memref<8x128xf32, #tpu.memory_space<vmem>>, vector<8x128xf32>,
    return
  }
  func.func @transform_0(%arg0: i32) -> (i32, i32) {
    %c0_i32 = arith.constant 0 : i32
    %c0_i32_0 = arith.constant 0 : i32
    %c0_i32_1 = arith.constant 0 : i32
    return %c0_i32, %c0_i32_0 : i32, i32
  }
  func.func @transform_1(%arg0: i32) -> (i32, i32) {
    %c0_i32 = arith.constant 0 : i32
    %c0_i32_0 = arith.constant 0 : i32
    return %c0_i32, %arg0 : i32, i32
  }
  func.func @transform_2(%arg0: i32) -> (i32, i32) {
    %c0_i32 = arith.constant 0 : i32
    %c0_i32_0 = arith.constant 0 : i32
    %c0_i32_1 = arith.constant 0 : i32
    return %c0_i32, %c0_i32_0 : i32, i32
  }
  func.func @transform_3(%arg0: i32) -> (i32, i32) {
    %c0_i32 = arith.constant 0 : i32
    %c0_i32_0 = arith.constant 0 : i32
    return %c0_i32, %arg0 : i32, i32
  }
}

module attributes {stable_mosaic.version = 11 : i64} {
  func.func @_gemm_bias_act_kernel(%arg0: i32, %arg1: memref<8x64xbf16, #tpu.memory_space<vmem>>, %arg2: memref<64x128xbf16, #tpu.memory_space<vmem>>, %arg3: memref<8x1xf32, #tpu.memory_space<vmem>>, %arg4: memref<8x128xf32, #tpu.memory_space<vmem>>) attributes {dimension_semantics = [#tpu.dimension_semantics<parallel>], iteration_bounds = array<i64: 1>, scalar_prefetch = 0 : i64, scratch_operands = 0 : i64, tpu.core_type = #tpu.core_type<tc>, window_params = [{pipeline_mode = #tpu.pipeline_mode<synchronous>, transform_indices = @transform_0, window_bounds = array<i64: 8, 64>}, {transform_indices = @transform_1, window_bounds = array<i64: 64, 128>}, {pipeline_mode = #tpu.pipeline_mode<synchronous>, transform_indices = @transform_2, window_bounds = array<i64: 8, 1>}, {transform_indices = @transform_3, window_bounds = array<i64: 8, 128>}]} {
    %c0 = arith.constant 0 : index
    %c0_0 = arith.constant 0 : index
    %0 = vector.load %arg1[%c0, %c0_0] : memref<8x64xbf16, #tpu.memory_space<vmem>>, vector<8x64xbf16>
    %c0_1 = arith.constant 0 : index
    %c0_2 = arith.constant 0 : index
    %1 = vector.load %arg2[%c0_1, %c0_2] : memref<64x128xbf16, #tpu.memory_space<vmem>>, vector<64x128xbf16>
    %cst = arith.constant dense<0.000000e+00> : vector<8x128xf32>
    %2 = tpu.matmul %0, %1, %cst {dimension_numbers = #tpu.dot_dimension_numbers<[1], [0], [0], [1], [0, 0, 1, 1], [], []>} : vector<8x64xbf16>, vector<64x128xbf16>, vector<8x128xf32> -> vector<8x128xf32>
    %c0_3 = arith.constant 0 : index
    %c0_4 = arith.constant 0 : index
    %3 = vector.load %arg3[%c0_3, %c0_4] : memref<8x1xf32, #tpu.memory_space<vmem>>, vector<8x1xf32>
    %4 = vector.broadcast %3 : vector<8x1xf32> to vector<8x128xf32>
    %5 = arith.addf %2, %4 : vector<8x128xf32>
    %cst_5 = arith.constant 0.000000e+00 : f32
    %6 = vector.broadcast %cst_5 : f32 to vector<8x128xf32>
    %7 = arith.cmpf ogt, %5, %6 : vector<8x128xf32>
    %cst_6 = arith.constant 0.00999999977 : f32
    %8 = vector.broadcast %cst_6 : f32 to vector<8x128xf32>
    %9 = arith.mulf %8, %5 : vector<8x128xf32>
    %10 = arith.select %7, %5, %9 : vector<8x128xi1>, vector<8x128xf32>
    %c0_7 = arith.constant 0 : index
    %c0_8 = arith.constant 0 : index
    %11 = vector.load %arg4[%c0_7, %c0_8] : memref<8x128xf32, #tpu.memory_space<vmem>>, vector<8x128xf32>
    tpu.vector_store %arg4[%c0_7, %c0_8], %10 {strides = array<i32>} : memref<8x128xf32, #tpu.memory_space<vmem>>, vector<8x128xf32>,
    return
  }
  func.func @transform_0(%arg0: i32) -> (i32, i32) {
    %c0_i32 = arith.constant 0 : i32
    %c0_i32_0 = arith.constant 0 : i32
    %c0_i32_1 = arith.constant 0 : i32
    return %c0_i32, %c0_i32_0 : i32, i32
  }
  func.func @transform_1(%arg0: i32) -> (i32, i32) {
    %c0_i32 = arith.constant 0 : i32
    %c0_i32_0 = arith.constant 0 : i32
    return %c0_i32, %arg0 : i32, i32
  }
  func.func @transform_2(%arg0: i32) -> (i32, i32) {
    %c0_i32 = arith.constant 0 : i32
    %c0_i32_0 = arith.constant 0 : i32
    %c0_i32_1 = arith.constant 0 : i32
    return %c0_i32, %c0_i32_0 : i32, i32
  }
  func.func @transform_3(%arg0: i32) -> (i32, i32) {
    %c0_i32 = arith.constant 0 : i32
    %c0_i32_0 = arith.constant 0 : i32
    return %c0_i32, %arg0 : i32, i32
  }
}

module attributes {stable_mosaic.version = 11 : i64} {
  func.func @_gemm_bias_act_kernel(%arg0: i32, %arg1: memref<8x40xbf16, #tpu.memory_space<vmem>>, %arg2: memref<40x128xbf16, #tpu.memory_space<vmem>>, %arg3: memref<8x1xf32, #tpu.memory_space<vmem>>, %arg4: memref<8x128xf32, #tpu.memory_space<vmem>>) attributes {dimension_semantics = [#tpu.dimension_semantics<parallel>], iteration_bounds = array<i64: 1>, scalar_prefetch = 0 : i64, scratch_operands = 0 : i64, tpu.core_type = #tpu.core_type<tc>, window_params = [{pipeline_mode = #tpu.pipeline_mode<synchronous>, transform_indices = @transform_0, window_bounds = array<i64: 8, 40>}, {transform_indices = @transform_1, window_bounds = array<i64: 40, 128>}, {pipeline_mode = #tpu.pipeline_mode<synchronous>, transform_indices = @transform_2, window_bounds = array<i64: 8, 1>}, {transform_indices = @transform_3, window_bounds = array<i64: 8, 128>}]} {
    %c0 = arith.constant 0 : index
    %c0_0 = arith.constant 0 : index
    %0 = vector.load %arg1[%c0, %c0_0] : memref<8x40xbf16, #tpu.memory_space<vmem>>, vector<8x40xbf16>
    %c0_1 = arith.constant 0 : index
    %c0_2 = arith.constant 0 : index
    %1 = vector.load %arg2[%c0_1, %c0_2] : memref<40x128xbf16, #tpu.memory_space<vmem>>, vector<40x128xbf16>
    %cst = arith.constant dense<0.000000e+00> : vector<8x128xf32>
    %2 = tpu.matmul %0, %1, %cst {dimension_numbers = #tpu.dot_dimension_numbers<[1], [0], [0], [1], [0, 0, 1, 1], [], []>} : vector<8x40xbf16>, vector<40x128xbf16>, vector<8x128xf32> -> vector<8x128xf32>
    %c0_3 = arith.constant 0 : index
    %c0_4 = arith.constant 0 : index
    %3 = vector.load %arg3[%c0_3, %c0_4] : memref<8x1xf32, #tpu.memory_space<vmem>>, vector<8x1xf32>
    %4 = vector.broadcast %3 : vector<8x1xf32> to vector<8x128xf32>
    %5 = arith.addf %2, %4 : vector<8x128xf32>
    %cst_5 = arith.constant 0.000000e+00 : f32
    %6 = vector.broadcast %cst_5 : f32 to vector<8x128xf32>
    %7 = arith.cmpf ogt, %5, %6 : vector<8x128xf32>
    %cst_6 = arith.constant 0.00999999977 : f32
    %8 = vector.broadcast %cst_6 : f32 to vector<8x128xf32>
    %9 = arith.mulf %8, %5 : vector<8x128xf32>
    %10 = arith.select %7, %5, %9 : vector<8x128xi1>, vector<8x128xf32>
    %c0_7 = arith.constant 0 : index
    %c0_8 = arith.constant 0 : index
    %11 = vector.load %arg4[%c0_7, %c0_8] : memref<8x128xf32, #tpu.memory_space<vmem>>, vector<8x128xf32>
    tpu.vector_store %arg4[%c0_7, %c0_8], %10 {strides = array<i32>} : memref<8x128xf32, #tpu.memory_space<vmem>>, vector<8x128xf32>,
    return
  }
  func.func @transform_0(%arg0: i32) -> (i32, i32) {
    %c0_i32 = arith.constant 0 : i32
    %c0_i32_0 = arith.constant 0 : i32
    %c0_i32_1 = arith.constant 0 : i32
    return %c0_i32, %c0_i32_0 : i32, i32
  }
  func.func @transform_1(%arg0: i32) -> (i32, i32) {
    %c0_i32 = arith.constant 0 : i32
    %c0_i32_0 = arith.constant 0 : i32
    return %c0_i32, %arg0 : i32, i32
  }
  func.func @transform_2(%arg0: i32) -> (i32, i32) {
    %c0_i32 = arith.constant 0 : i32
    %c0_i32_0 = arith.constant 0 : i32
    %c0_i32_1 = arith.constant 0 : i32
    return %c0_i32, %c0_i32_0 : i32, i32
  }
  func.func @transform_3(%arg0: i32) -> (i32, i32) {
    %c0_i32 = arith.constant 0 : i32
    %c0_i32_0 = arith.constant 0 : i32
    return %c0_i32, %arg0 : i32, i32
  }
}

module attributes {stable_mosaic.version = 11 : i64} {
  func.func @_gemm_bias_act_kernel(%arg0: i32, %arg1: memref<16x144xbf16, #tpu.memory_space<vmem>>, %arg2: memref<144x128xbf16, #tpu.memory_space<vmem>>, %arg3: memref<16x1xf32, #tpu.memory_space<vmem>>, %arg4: memref<16x128xf32, #tpu.memory_space<vmem>>) attributes {dimension_semantics = [#tpu.dimension_semantics<parallel>], iteration_bounds = array<i64: 1>, scalar_prefetch = 0 : i64, scratch_operands = 0 : i64, tpu.core_type = #tpu.core_type<tc>, window_params = [{pipeline_mode = #tpu.pipeline_mode<synchronous>, transform_indices = @transform_0, window_bounds = array<i64: 16, 144>}, {transform_indices = @transform_1, window_bounds = array<i64: 144, 128>}, {pipeline_mode = #tpu.pipeline_mode<synchronous>, transform_indices = @transform_2, window_bounds = array<i64: 16, 1>}, {transform_indices = @transform_3, window_bounds = array<i64: 16, 128>}]} {
    %c0 = arith.constant 0 : index
    %c0_0 = arith.constant 0 : index
    %0 = vector.load %arg1[%c0, %c0_0] : memref<16x144xbf16, #tpu.memory_space<vmem>>, vector<16x144xbf16>
    %c0_1 = arith.constant 0 : index
    %c0_2 = arith.constant 0 : index
    %1 = vector.load %arg2[%c0_1, %c0_2] : memref<144x128xbf16, #tpu.memory_space<vmem>>, vector<144x128xbf16>
    %cst = arith.constant dense<0.000000e+00> : vector<16x128xf32>
    %2 = tpu.matmul %0, %1, %cst {dimension_numbers = #tpu.dot_dimension_numbers<[1], [0], [0], [1], [0, 0, 1, 1], [], []>} : vector<16x144xbf16>, vector<144x128xbf16>, vector<16x128xf32> -> vector<16x128xf32>
    %c0_3 = arith.constant 0 : index
    %c0_4 = arith.constant 0 : index
    %3 = vector.load %arg3[%c0_3, %c0_4] : memref<16x1xf32, #tpu.memory_space<vmem>>, vector<16x1xf32>
    %4 = vector.broadcast %3 : vector<16x1xf32> to vector<16x128xf32>
    %5 = arith.addf %2, %4 : vector<16x128xf32>
    %cst_5 = arith.constant 0.000000e+00 : f32
    %6 = vector.broadcast %cst_5 : f32 to vector<16x128xf32>
    %7 = arith.cmpf ogt, %5, %6 : vector<16x128xf32>
    %cst_6 = arith.constant 0.00999999977 : f32
    %8 = vector.broadcast %cst_6 : f32 to vector<16x128xf32>
    %9 = arith.mulf %8, %5 : vector<16x128xf32>
    %10 = arith.select %7, %5, %9 : vector<16x128xi1>, vector<16x128xf32>
    %c0_7 = arith.constant 0 : index
    %c0_8 = arith.constant 0 : index
    %11 = vector.load %arg4[%c0_7, %c0_8] : memref<16x128xf32, #tpu.memory_space<vmem>>, vector<16x128xf32>
    tpu.vector_store %arg4[%c0_7, %c0_8], %10 {strides = array<i32>} : memref<16x128xf32, #tpu.memory_space<vmem>>, vector<16x128xf32>,
    return
  }
  func.func @transform_0(%arg0: i32) -> (i32, i32) {
    %c0_i32 = arith.constant 0 : i32
    %c0_i32_0 = arith.constant 0 : i32
    %c0_i32_1 = arith.constant 0 : i32
    return %c0_i32, %c0_i32_0 : i32, i32
  }
  func.func @transform_1(%arg0: i32) -> (i32, i32) {
    %c0_i32 = arith.constant 0 : i32
    %c0_i32_0 = arith.constant 0 : i32
    return %c0_i32, %arg0 : i32, i32
  }
  func.func @transform_2(%arg0: i32) -> (i32, i32) {
    %c0_i32 = arith.constant 0 : i32
    %c0_i32_0 = arith.constant 0 : i32
    %c0_i32_1 = arith.constant 0 : i32
    return %c0_i32, %c0_i32_0 : i32, i32
  }
  func.func @transform_3(%arg0: i32) -> (i32, i32) {
    %c0_i32 = arith.constant 0 : i32
    %c0_i32_0 = arith.constant 0 : i32
    return %c0_i32, %arg0 : i32, i32
  }
}

</mosaic_0001>

<llo_original>
// kernel: multi_branch_stem_m12x.11
$region0: #{multi_branch_stem_m12x.11}
  #allocation0 [shape = 'u32[]', space=smem, size = 0x4, offset = 0x4, fixed_abs, tag = 'smem constant byte address 0x4 - core index']
  #allocation1 [shape = 'u32[144,128]{1,0:T(1,128)}', space=vmem, size = 0x12000, scoped, tag = 'internal scratch']
  %s0 = inlined_call_operand.vmem [shape: bf16[8,40], index: 0, kind: input, shape index: {}]
  %s1 = inlined_call_operand.vmem [shape: bf16[40,384], index: 1, kind: input, shape index: {}]
  %s2 = inlined_call_operand.vmem [shape: f32[8,1], index: 2, kind: input, shape index: {}]
  %s3 = inlined_call_operand.vmem [shape: f32[8,384], index: 3, kind: output, shape index: {}]
  %s4 = sld [smem:[#allocation0]]
  $region22: #{multi_branch_stem_m12x.11} parent=0
    _
  %s6 = ssub.s32 1, %s4
  %s7 = scalar_select 0, %s6, %s4
  // Predicated region
  $region2: #{multi_branch_stem_m12x.11} parent=0 // pred_check
    _
  $region3: #{multi_branch_stem_m12x.11} parent=0 // pred_check_branch
    %9 = sbr.rel (0) target = $region5
  $region4: #{multi_branch_stem_m12x.11} parent=0 // pred_region
    _
  $region5: #{multi_branch_stem_m12x.11} parent=0 // pred_fallthru
    _
  // Predicated region
  $region6: #{multi_branch_stem_m12x.11} parent=0 // pred_check
    _
  $region7: #{multi_branch_stem_m12x.11} parent=0 // pred_check_branch
    %11 = sbr.rel (0) target = $region9
  $region8: #{multi_branch_stem_m12x.11} parent=0 // pred_region
    _
  $region9: #{multi_branch_stem_m12x.11} parent=0 // pred_fallthru
    _
  // Predicated region
  $region10: #{multi_branch_stem_m12x.11} parent=0 // pred_check
    _
  $region11: #{multi_branch_stem_m12x.11} parent=0 // pred_check_branch
    %13 = sbr.rel (0) target = $region13
  $region12: #{multi_branch_stem_m12x.11} parent=0 // pred_region
    _
  $region13: #{multi_branch_stem_m12x.11} parent=0 // pred_fallthru
    _
  %v15 = vld [vmem:[%s0] sm:$0xf]
  %v16 = vld [vmem:[%s1] sm:$0xff]
  %v17 = vld [vmem:[%s1 + $0x8] sm:$0xf]
  %v18 = vld [vmem:[%s1 + $0xc] sm:$0xff]
  %v19 = vld [vmem:[%s1 + $0x14] sm:$0xf]
  %v20 = vld [vmem:[%s1 + $0x18] sm:$0xff]
  %v21 = vld [vmem:[%s1 + $0x20] sm:$0xf]
  %v22 = vld [vmem:[%s1 + $0x24] sm:$0xff]
  %v23 = vld [vmem:[%s1 + $0x2c] sm:$0xf]
  %v24 = vld [vmem:[%s1 + $0x30] sm:$0xff]
  %v25 = vld [vmem:[%s1 + $0x38] sm:$0xf]
  %v26 = vld [vmem:[%s2] sm:$0xff]
  %28 = vset.pattern.permute.xlu0 0
  %29 = vperm.xlu0 %28, %v26
  %v30 = vpop.permute.xlu0 %29
  %v42 = vunpack.c.l.b16 %v16
  %v43 = vunpack.c.h.b16 %v16
  %v44 = vunpack.c.l.b16 %v17
  %v45 = vunpack.c.l.b16 %v18
  %v46 = vunpack.c.h.b16 %v18
  %v47 = vunpack.c.l.b16 %v19
  %v48 = vunpack.c.l.b16 %v20
  %v49 = vunpack.c.h.b16 %v20
  %v50 = vunpack.c.l.b16 %v21
  %v51 = vunpack.c.l.b16 %v22
  %v52 = vunpack.c.h.b16 %v22
  %v53 = vunpack.c.l.b16 %v23
  %v54 = vunpack.c.l.b16 %v24
  %v55 = vunpack.c.h.b16 %v24
  %v56 = vunpack.c.l.b16 %v25
  %v57 = vpack.c.b16 %v45, %v42
  %v58 = vpack.c.b16 %v46, %v43
  %v59 = vpack.c.b16 %v47, %v44
  %v60 = vpack.c.b16 %v51, %v48
  %v61 = vpack.c.b16 %v52, %v49
  %v62 = vpack.c.b16 %v53, %v50
  %v63 = vpack.c.b16 %v54, %v54
  %v64 = vpack.c.b16 %v55, %v55
  %v65 = vpack.c.b16 %v56, %v56
  %vm72 = vcmask 326656
  %v74 = vsel %vm72, %v15, 0
  %vm76 = vcmask 1043456
  %v78 = vsel %vm76, %v63, 0
  %v81 = vsel %vm76, %v64, 0
  %v84 = vsel %vm76, %v65, 0
  %86 = vmatprep.subr.bf16.mxu0 %v58
  %87 = vmatpush1.bf16.msra.mxu0 %v57
  %88 = vmatprep.subr.bf16.mxu0 %v61
  %89 = vmatpush1.bf16.msra.mxu0 %v60
  %90 = vmatprep.subr.bf16.mxu0 %v81
  %91 = vmatpush1.bf16.msra.mxu0 %v78
  %92 = vmatprep.subr.bf16.mxu0 0
  %93 = vmatpush1.bf16.msra.mxu0 0
  %94 = vmatprep.subr.bf16.mxu0 0
  %95 = vmatpush1.bf16.msra.mxu0 0
  %96 = vmatprep.subr.bf16.mxu0 0
  %97 = vmatpush1.bf16.msra.mxu0 0
  %98 = vmatprep.subr.bf16.mxu0 0
  %99 = vmatpush1.bf16.msra.mxu0 0
  %100 = vmatprep.subr.bf16.mxu0 0
  %101 = vmatpush1.bf16.msra.mxu0 0
  %102 = vmatprep.subr.bf16.mxu0 0
  %103 = vmatpush1.bf16.msra.mxu0 0
  %104 = vmatprep.subr.bf16.mxu0 0
  %105 = vmatpush1.bf16.msra.mxu0 0
  %106 = vmatprep.subr.bf16.mxu0 0
  %107 = vmatpush1.bf16.msra.mxu0 0
  %108 = vmatprep.subr.bf16.mxu0 0
  %109 = vmatpush1.bf16.msra.mxu0 0
  %110 = vmatprep.subr.bf16.mxu0 0
  %111 = vmatpush1.bf16.msra.mxu0 0
  %112 = vmatprep.subr.bf16.mxu0 0
  %113 = vmatpush1.bf16.msra.mxu0 0
  %114 = vmatprep.subr.bf16.mxu0 0
  %115 = vmatpush1.bf16.msra.mxu0 0
  %116 = vmatprep.subr.bf16.mxu0 0
  %117 = vmatpush1.bf16.msra.mxu0 0
  %118 = vmatprep.mubr.bf16.mxu0 0
  %119 = vmatmul.mubr.bf16.gmra.mrb[0].mxu0 %v74
  %v120 = vpop.f32.mrb[0].mxu0
  %v121 = vadd.f32 %v30, %v120
  %v122 = vpop.f32.mrb[0].mxu0
  %v123 = vadd.f32 %v30, %v122
  %v124 = vpop.f32.mrb[0].mxu0
  %v125 = vpop.f32.mrb[0].mxu0
  %126 = vdwg.mxu0
  %127 = vmatprep.subr.bf16.mxu0 0
  %128 = vmatpush1.bf16.msra.mxu0 %v59
  %129 = vmatprep.subr.bf16.mxu0 0
  %130 = vmatpush1.bf16.msra.mxu0 %v62
  %131 = vmatprep.subr.bf16.mxu0 0
  %132 = vmatpush1.bf16.msra.mxu0 %v84
  %133 = vmatprep.subr.bf16.mxu0 0
  %134 = vmatpush1.bf16.msra.mxu0 0
  %135 = vmatprep.subr.bf16.mxu0 0
  %136 = vmatpush1.bf16.msra.mxu0 0
  %137 = vmatprep.subr.bf16.mxu0 0
  %138 = vmatpush1.bf16.msra.mxu0 0
  %139 = vmatprep.subr.bf16.mxu0 0
  %140 = vmatpush1.bf16.msra.mxu0 0
  %141 = vmatprep.subr.bf16.mxu0 0
  %142 = vmatpush1.bf16.msra.mxu0 0
  %143 = vmatprep.subr.bf16.mxu0 0
  %144 = vmatpush1.bf16.msra.mxu0 0
  %145 = vmatprep.subr.bf16.mxu0 0
  %146 = vmatpush1.bf16.msra.mxu0 0
  %147 = vmatprep.subr.bf16.mxu0 0
  %148 = vmatpush1.bf16.msra.mxu0 0
  %149 = vmatprep.subr.bf16.mxu0 0
  %150 = vmatpush1.bf16.msra.mxu0 0
  %151 = vmatprep.subr.bf16.mxu0 0
  %152 = vmatpush1.bf16.msra.mxu0 0
  %153 = vmatprep.subr.bf16.mxu0 0
  %154 = vmatpush1.bf16.msra.mxu0 0
  %155 = vmatprep.subr.bf16.mxu0 0
  %156 = vmatpush1.bf16.msra.mxu0 0
  %157 = vmatprep.subr.bf16.mxu0 0
  %158 = vmatpush1.bf16.msra.mxu0 0
  %159 = vmatprep.mubr.bf16.mxu0 0
  %160 = vmatmul.mubr.bf16.gmra.mrb[0].mxu0 %v74
  %v161 = vpop.f32.mrb[0].mxu0
  %v162 = vadd.f32 %v30, %v161
  %v163 = vpop.f32.mrb[0].mxu0
  %v164 = vpop.f32.mrb[0].mxu0
  %v165 = vpop.f32.mrb[0].mxu0
  %166 = vdwg.mxu0
  %vm167 = vcmp.gt.f32.partialorder %v121, 0.0
  %vm168 = vcmp.gt.f32.partialorder %v123, 0.0
  %vm169 = vcmp.gt.f32.partialorder %v162, 0.0
  %v170 = vmul.f32 %v121, 0.01
  %v171 = vmul.f32 %v123, 0.01
  %v172 = vmul.f32 %v162, 0.01
  %v173 = vsel %vm167, %v121, %v170
  %v174 = vsel %vm168, %v123, %v171
  %v175 = vsel %vm169, %v162, %v172
  %176 = vst [vmem:[%s3] sm:$0xff] %v173
  %177 = vst [vmem:[%s3 + $0x8] sm:$0xff] %v174
  %178 = vst [vmem:[%s3 + $0x10] sm:$0xff] %v175
  // Predicated region
  $region14: #{multi_branch_stem_m12x.11} parent=0 // pred_check
    _
  $region15: #{multi_branch_stem_m12x.11} parent=0 // pred_check_branch
    %180 = sbr.rel (0) target = $region17
  $region16: #{multi_branch_stem_m12x.11} parent=0 // pred_region
    _
  $region17: #{multi_branch_stem_m12x.11} parent=0 // pred_fallthru
    _
  // Predicated region
  $region18: #{multi_branch_stem_m12x.11} parent=0 // pred_check
    _
  $region19: #{multi_branch_stem_m12x.11} parent=0 // pred_check_branch
    %182 = sbr.rel (0) target = $region21
  $region20: #{multi_branch_stem_m12x.11} parent=0 // pred_region
    _
  $region21: #{multi_branch_stem_m12x.11} parent=0 // pred_fallthru
    _

// kernel: multi_branch_stem_m12x.14
$region0: #{multi_branch_stem_m12x.14}
  #allocation0 [shape = 'u32[]', space=smem, size = 0x4, offset = 0x4, fixed_abs, tag = 'smem constant byte address 0x4 - core index']
  #allocation1 [shape = 'u32[144,128]{1,0:T(1,128)}', space=vmem, size = 0x12000, scoped, tag = 'internal scratch']
  %s0 = inlined_call_operand.vmem [shape: f32[4,8,8,8], index: 0, kind: input, shape index: {}]
  %s1 = inlined_call_operand.vmem [shape: f32[8,6,6], index: 1, kind: output, shape index: {}]
  %s2 = sld [smem:[#allocation0]]
  $region14: #{multi_branch_stem_m12x.14} parent=0
    _
  %s4 = ssub.s32 1, %s2
  %s5 = scalar_select 0, %s4, %s2
  // Predicated region
  $region2: #{multi_branch_stem_m12x.14} parent=0 // pred_check
    _
  $region3: #{multi_branch_stem_m12x.14} parent=0 // pred_check_branch
    %7 = sbr.rel (0) target = $region5
  $region4: #{multi_branch_stem_m12x.14} parent=0 // pred_region
    _
  $region5: #{multi_branch_stem_m12x.14} parent=0 // pred_fallthru
    _
  %v8 = vld [vmem:[%s0] sm:$0xff]
  %v9 = vld [vmem:[%s0 + $0x8] sm:$0xff]
  %v10 = vld [vmem:[%s0 + $0x10] sm:$0xff]
  %v11 = vld [vmem:[%s0 + $0x18] sm:$0xff]
  %v12 = vld [vmem:[%s0 + $0x20] sm:$0xff]
  %v13 = vld [vmem:[%s0 + $0x28] sm:$0xff]
  %v14 = vld [vmem:[%s0 + $0x30] sm:$0xff]
  %v15 = vld [vmem:[%s0 + $0x38] sm:$0xff]
  %v16 = vld [vmem:[%s0 + $0x40] sm:$0xff]
  %v17 = vld [vmem:[%s0 + $0x48] sm:$0xff]
  %v18 = vld [vmem:[%s0 + $0x50] sm:$0xff]
  %v19 = vld [vmem:[%s0 + $0x58] sm:$0xff]
  %v20 = vld [vmem:[%s0 + $0x60] sm:$0xff]
  %v21 = vld [vmem:[%s0 + $0x68] sm:$0xff]
  %v22 = vld [vmem:[%s0 + $0x70] sm:$0xff]
  %v23 = vld [vmem:[%s0 + $0x78] sm:$0xff]
  %v24 = vld [vmem:[%s0 + $0x80] sm:$0xff]
  %v25 = vld [vmem:[%s0 + $0x88] sm:$0xff]
  %v26 = vld [vmem:[%s0 + $0x90] sm:$0xff]
  %v27 = vld [vmem:[%s0 + $0x98] sm:$0xff]
  %v28 = vld [vmem:[%s0 + $0xa0] sm:$0xff]
  %v29 = vld [vmem:[%s0 + $0xa8] sm:$0xff]
  %v30 = vld [vmem:[%s0 + $0xb0] sm:$0xff]
  %v31 = vld [vmem:[%s0 + $0xb8] sm:$0xff]
  %v32 = vld [vmem:[%s0 + $0xc0] sm:$0xff]
  %v33 = vld [vmem:[%s0 + $0xc8] sm:$0xff]
  %v34 = vld [vmem:[%s0 + $0xd0] sm:$0xff]
  %v35 = vld [vmem:[%s0 + $0xd8] sm:$0xff]
  %v36 = vld [vmem:[%s0 + $0xe0] sm:$0xff]
  %v37 = vld [vmem:[%s0 + $0xe8] sm:$0xff]
  %v38 = vld [vmem:[%s0 + $0xf0] sm:$0xff]
  %v39 = vld [vmem:[%s0 + $0xf8] sm:$0xff]
  %v40 = vmax.f32 %v8, %v16
  %v41 = vmax.f32 %v9, %v17
  %v42 = vmax.f32 %v10, %v18
  %v43 = vmax.f32 %v11, %v19
  %v44 = vmax.f32 %v12, %v20
  %v45 = vmax.f32 %v13, %v21
  %v46 = vmax.f32 %v14, %v22
  %v47 = vmax.f32 %v15, %v23
  %56 = vrot.lane.b32.xlu0 %v8, 127
  %v57 = vpop.permute.xlu0 %56
  %58 = vrot.lane.b32.xlu0 %v9, 127
  %v59 = vpop.permute.xlu0 %58
  %60 = vrot.lane.b32.xlu0 %v10, 127
  %v61 = vpop.permute.xlu0 %60
  %62 = vrot.lane.b32.xlu0 %v11, 127
  %v63 = vpop.permute.xlu0 %62
  %64 = vrot.lane.b32.xlu0 %v12, 127
  %v65 = vpop.permute.xlu0 %64
  %66 = vrot.lane.b32.xlu0 %v13, 127
  %v67 = vpop.permute.xlu0 %66
  %68 = vrot.lane.b32.xlu0 %v14, 127
  %v69 = vpop.permute.xlu0 %68
  %70 = vrot.lane.b32.xlu0 %v15, 127
  %v71 = vpop.permute.xlu0 %70
  %v80 = vmax.f32 %v40, %v57
  %v81 = vmax.f32 %v41, %v59
  %v82 = vmax.f32 %v42, %v61
  %v83 = vmax.f32 %v43, %v63
  %v84 = vmax.f32 %v44, %v65
  %v85 = vmax.f32 %v45, %v67
  %v86 = vmax.f32 %v46, %v69
  %v87 = vmax.f32 %v47, %v71
  %96 = vrot.lane.b32.xlu0 %v16, 127
  %v97 = vpop.permute.xlu0 %96
  %98 = vrot.lane.b32.xlu0 %v17, 127
  %v99 = vpop.permute.xlu0 %98
  %100 = vrot.lane.b32.xlu0 %v18, 127
  %v101 = vpop.permute.xlu0 %100
  %102 = vrot.lane.b32.xlu0 %v19, 127
  %v103 = vpop.permute.xlu0 %102
  %104 = vrot.lane.b32.xlu0 %v20, 127
  %v105 = vpop.permute.xlu0 %104
  %106 = vrot.lane.b32.xlu0 %v21, 127
  %v107 = vpop.permute.xlu0 %106
  %108 = vrot.lane.b32.xlu0 %v22, 127
  %v109 = vpop.permute.xlu0 %108
  %110 = vrot.lane.b32.xlu0 %v23, 127
  %v111 = vpop.permute.xlu0 %110
  %v120 = vmax.f32 %v80, %v97
  %v121 = vmax.f32 %v81, %v99
  %v122 = vmax.f32 %v82, %v101
  %v123 = vmax.f32 %v83, %v103
  %v124 = vmax.f32 %v84, %v105
  %v125 = vmax.f32 %v85, %v107
  %v126 = vmax.f32 %v86, %v109
  %v127 = vmax.f32 %v87, %v111
  %128 = vrot.lane.b32.xlu0 %v8, 126
  %v129 = vpop.permute.xlu0 %128
  %130 = vrot.lane.b32.xlu0 %v9, 126
  %v131 = vpop.permute.xlu0 %130
  %132 = vrot.lane.b32.xlu0 %v10, 126
  %v133 = vpop.permute.xlu0 %132
  %134 = vrot.lane.b32.xlu0 %v11, 126
  %v135 = vpop.permute.xlu0 %134
  %136 = vrot.lane.b32.xlu0 %v12, 126
  %v137 = vpop.permute.xlu0 %136
  %138 = vrot.lane.b32.xlu0 %v13, 126
  %v139 = vpop.permute.xlu0 %138
  %140 = vrot.lane.b32.xlu0 %v14, 126
  %v141 = vpop.permute.xlu0 %140
  %142 = vrot.lane.b32.xlu0 %v15, 126
  %v143 = vpop.permute.xlu0 %142
  %v152 = vmax.f32 %v120, %v129
  %v153 = vmax.f32 %v121, %v131
  %v154 = vmax.f32 %v122, %v133
  %v155 = vmax.f32 %v123, %v135
  %v156 = vmax.f32 %v124, %v137
  %v157 = vmax.f32 %v125, %v139
  %v158 = vmax.f32 %v126, %v141
  %v159 = vmax.f32 %v127, %v143
  %v160 = vmax.f32 %v152, %v24
  %v161 = vmax.f32 %v153, %v25
  %v162 = vmax.f32 %v154, %v26
  %v163 = vmax.f32 %v155, %v27
  %v164 = vmax.f32 %v156, %v28
  %v165 = vmax.f32 %v157, %v29
  %v166 = vmax.f32 %v158, %v30
  %v167 = vmax.f32 %v159, %v31
  %v168 = vmax.f32 %v160, %v32
  %v169 = vmax.f32 %v161, %v33
  %v170 = vmax.f32 %v162, %v34
  %v171 = vmax.f32 %v163, %v35
  %v172 = vmax.f32 %v164, %v36
  %v173 = vmax.f32 %v165, %v37
  %v174 = vmax.f32 %v166, %v38
  %v175 = vmax.f32 %v167, %v39
  %184 = vrot.lane.b32.xlu0 %v24, 127
  %v185 = vpop.permute.xlu0 %184
  %186 = vrot.lane.b32.xlu0 %v25, 127
  %v187 = vpop.permute.xlu0 %186
  %188 = vrot.lane.b32.xlu0 %v26, 127
  %v189 = vpop.permute.xlu0 %188
  %190 = vrot.lane.b32.xlu0 %v27, 127
  %v191 = vpop.permute.xlu0 %190
  %192 = vrot.lane.b32.xlu0 %v28, 127
  %v193 = vpop.permute.xlu0 %192
  %194 = vrot.lane.b32.xlu0 %v29, 127
  %v195 = vpop.permute.xlu0 %194
  %196 = vrot.lane.b32.xlu0 %v30, 127
  %v197 = vpop.permute.xlu0 %196
  %198 = vrot.lane.b32.xlu0 %v31, 127
  %v199 = vpop.permute.xlu0 %198
  %v208 = vmax.f32 %v168, %v185
  %v209 = vmax.f32 %v169, %v187
  %v210 = vmax.f32 %v170, %v189
  %v211 = vmax.f32 %v171, %v191
  %v212 = vmax.f32 %v172, %v193
  %v213 = vmax.f32 %v173, %v195
  %v214 = vmax.f32 %v174, %v197
  %v215 = vmax.f32 %v175, %v199
  %224 = vrot.lane.b32.xlu0 %v32, 127
  %v225 = vpop.permute.xlu0 %224
  %226 = vrot.lane.b32.xlu0 %v33, 127
  %v227 = vpop.permute.xlu0 %226
  %228 = vrot.lane.b32.xlu0 %v34, 127
  %v229 = vpop.permute.xlu0 %228
  %230 = vrot.lane.b32.xlu0 %v35, 127
  %v231 = vpop.permute.xlu0 %230
  %232 = vrot.lane.b32.xlu0 %v36, 127
  %v233 = vpop.permute.xlu0 %232
  %234 = vrot.lane.b32.xlu0 %v37, 127
  %v235 = vpop.permute.xlu0 %234
  %236 = vrot.lane.b32.xlu0 %v38, 127
  %v237 = vpop.permute.xlu0 %236
  %238 = vrot.lane.b32.xlu0 %v39, 127
  %v239 = vpop.permute.xlu0 %238
  %v248 = vmax.f32 %v208, %v225
  %v249 = vmax.f32 %v209, %v227
  %v250 = vmax.f32 %v210, %v229
  %v251 = vmax.f32 %v211, %v231
  %v252 = vmax.f32 %v212, %v233
  %v253 = vmax.f32 %v213, %v235
  %v254 = vmax.f32 %v214, %v237
  %v255 = vmax.f32 %v215, %v239
  %256 = vrot.lane.b32.xlu0 %v24, 126
  %v257 = vpop.permute.xlu0 %256
  %258 = vrot.lane.b32.xlu0 %v25, 126
  %v259 = vpop.permute.xlu0 %258
  %260 = vrot.lane.b32.xlu0 %v26, 126
  %v261 = vpop.permute.xlu0 %260
  %262 = vrot.lane.b32.xlu0 %v27, 126
  %v263 = vpop.permute.xlu0 %262
  %264 = vrot.lane.b32.xlu0 %v28, 126
  %v265 = vpop.permute.xlu0 %264
  %266 = vrot.lane.b32.xlu0 %v29, 126
  %v267 = vpop.permute.xlu0 %266
  %268 = vrot.lane.b32.xlu0 %v30, 126
  %v269 = vpop.permute.xlu0 %268
  %270 = vrot.lane.b32.xlu0 %v31, 126
  %v271 = vpop.permute.xlu0 %270
  %v280 = vmax.f32 %v248, %v257
  %v281 = vmax.f32 %v249, %v259
  %v282 = vmax.f32 %v250, %v261
  %v283 = vmax.f32 %v251, %v263
  %v284 = vmax.f32 %v252, %v265
  %v285 = vmax.f32 %v253, %v267
  %v286 = vmax.f32 %v254, %v269
  %v287 = vmax.f32 %v255, %v271
  %v288 = vrot.slane %v8, 1
  %v289 = vrot.slane %v9, 1
  %v290 = vrot.slane %v10, 1
  %v291 = vrot.slane %v11, 1
  %v292 = vrot.slane %v12, 1
  %v293 = vrot.slane %v13, 1
  %v294 = vrot.slane %v14, 1
  %v295 = vrot.slane %v15, 1
  %v304 = vmax.f32 %v280, %v288
  %v305 = vmax.f32 %v281, %v289
  %v306 = vmax.f32 %v282, %v290
  %v307 = vmax.f32 %v283, %v291
  %v308 = vmax.f32 %v284, %v292
  %v309 = vmax.f32 %v285, %v293
  %v310 = vmax.f32 %v286, %v294
  %v311 = vmax.f32 %v287, %v295
  %v312 = vrot.slane %v16, 1
  %v313 = vrot.slane %v17, 1
  %v314 = vrot.slane %v18, 1
  %v315 = vrot.slane %v19, 1
  %v316 = vrot.slane %v20, 1
  %v317 = vrot.slane %v21, 1
  %v318 = vrot.slane %v22, 1
  %v319 = vrot.slane %v23, 1
  %v328 = vmax.f32 %v304, %v312
  %v329 = vmax.f32 %v305, %v313
  %v330 = vmax.f32 %v306, %v314
  %v331 = vmax.f32 %v307, %v315
  %v332 = vmax.f32 %v308, %v316
  %v333 = vmax.f32 %v309, %v317
  %v334 = vmax.f32 %v310, %v318
  %v335 = vmax.f32 %v311, %v319
  %336 = vrot.lane.b32.xlu0 %v288, 127
  %v337 = vpop.permute.xlu0 %336
  %338 = vrot.lane.b32.xlu0 %v289, 127
  %v339 = vpop.permute.xlu0 %338
  %340 = vrot.lane.b32.xlu0 %v290, 127
  %v341 = vpop.permute.xlu0 %340
  %342 = vrot.lane.b32.xlu0 %v291, 127
  %v343 = vpop.permute.xlu0 %342
  %344 = vrot.lane.b32.xlu0 %v292, 127
  %v345 = vpop.permute.xlu0 %344
  %346 = vrot.lane.b32.xlu0 %v293, 127
  %v347 = vpop.permute.xlu0 %346
  %348 = vrot.lane.b32.xlu0 %v294, 127
  %v349 = vpop.permute.xlu0 %348
  %350 = vrot.lane.b32.xlu0 %v295, 127
  %v351 = vpop.permute.xlu0 %350
  %v360 = vmax.f32 %v328, %v337
  %v361 = vmax.f32 %v329, %v339
  %v362 = vmax.f32 %v330, %v341
  %v363 = vmax.f32 %v331, %v343
  %v364 = vmax.f32 %v332, %v345
  %v365 = vmax.f32 %v333, %v347
  %v366 = vmax.f32 %v334, %v349
  %v367 = vmax.f32 %v335, %v351
  %368 = vrot.lane.b32.xlu0 %v312, 127
  %v369 = vpop.permute.xlu0 %368
  %370 = vrot.lane.b32.xlu0 %v313, 127
  %v371 = vpop.permute.xlu0 %370
  %372 = vrot.lane.b32.xlu0 %v314, 127
  %v373 = vpop.permute.xlu0 %372
  %374 = vrot.lane.b32.xlu0 %v315, 127
  %v375 = vpop.permute.xlu0 %374
  %376 = vrot.lane.b32.xlu0 %v316, 127
  %v377 = vpop.permute.xlu0 %376
  %378 = vrot.lane.b32.xlu0 %v317, 127
  %v379 = vpop.permute.xlu0 %378
  %380 = vrot.lane.b32.xlu0 %v318, 127
  %v381 = vpop.permute.xlu0 %380
  %382 = vrot.lane.b32.xlu0 %v319, 127
  %v383 = vpop.permute.xlu0 %382
  %v392 = vmax.f32 %v360, %v369
  %v393 = vmax.f32 %v361, %v371
  %v394 = vmax.f32 %v362, %v373
  %v395 = vmax.f32 %v363, %v375
  %v396 = vmax.f32 %v364, %v377
  %v397 = vmax.f32 %v365, %v379
  %v398 = vmax.f32 %v366, %v381
  %v399 = vmax.f32 %v367, %v383
  %400 = vrot.lane.b32.xlu0 %v288, 126
  %v401 = vpop.permute.xlu0 %400
  %402 = vrot.lane.b32.xlu0 %v289, 126
  %v403 = vpop.permute.xlu0 %402
  %404 = vrot.lane.b32.xlu0 %v290, 126
  %v405 = vpop.permute.xlu0 %404
  %406 = vrot.lane.b32.xlu0 %v291, 126
  %v407 = vpop.permute.xlu0 %406
  %408 = vrot.lane.b32.xlu0 %v292, 126
  %v409 = vpop.permute.xlu0 %408
  %410 = vrot.lane.b32.xlu0 %v293, 126
  %v411 = vpop.permute.xlu0 %410
  %412 = vrot.lane.b32.xlu0 %v294, 126
  %v413 = vpop.permute.xlu0 %412
  %414 = vrot.lane.b32.xlu0 %v295, 126
  %v415 = vpop.permute.xlu0 %414
  %v424 = vmax.f32 %v392, %v401
  %v425 = vmax.f32 %v393, %v403
  %v426 = vmax.f32 %v394, %v405
  %v427 = vmax.f32 %v395, %v407
  %v428 = vmax.f32 %v396, %v409
  %v429 = vmax.f32 %v397, %v411
  %v430 = vmax.f32 %v398, %v413
  %v431 = vmax.f32 %v399, %v415
  %v432 = vrot.slane %v24, 1
  %v433 = vrot.slane %v25, 1
  %v434 = vrot.slane %v26, 1
  %v435 = vrot.slane %v27, 1
  %v436 = vrot.slane %v28, 1
  %v437 = vrot.slane %v29, 1
  %v438 = vrot.slane %v30, 1
  %v439 = vrot.slane %v31, 1
  %v448 = vmax.f32 %v424, %v432
  %v449 = vmax.f32 %v425, %v433
  %v450 = vmax.f32 %v426, %v434
  %v451 = vmax.f32 %v427, %v435
  %v452 = vmax.f32 %v428, %v436
  %v453 = vmax.f32 %v429, %v437
  %v454 = vmax.f32 %v430, %v438
  %v455 = vmax.f32 %v431, %v439
  %v456 = vrot.slane %v32, 1
  %v457 = vrot.slane %v33, 1
  %v458 = vrot.slane %v34, 1
  %v459 = vrot.slane %v35, 1
  %v460 = vrot.slane %v36, 1
  %v461 = vrot.slane %v37, 1
  %v462 = vrot.slane %v38, 1
  %v463 = vrot.slane %v39, 1
  %v472 = vmax.f32 %v448, %v456
  %v473 = vmax.f32 %v449, %v457
  %v474 = vmax.f32 %v450, %v458
  %v475 = vmax.f32 %v451, %v459
  %v476 = vmax.f32 %v452, %v460
  %v477 = vmax.f32 %v453, %v461
  %v478 = vmax.f32 %v454, %v462
  %v479 = vmax.f32 %v455, %v463
  %480 = vrot.lane.b32.xlu0 %v432, 127
  %v481 = vpop.permute.xlu0 %480
  %482 = vrot.lane.b32.xlu0 %v433, 127
  %v483 = vpop.permute.xlu0 %482
  %484 = vrot.lane.b32.xlu0 %v434, 127
  %v485 = vpop.permute.xlu0 %484
  %486 = vrot.lane.b32.xlu0 %v435, 127
  %v487 = vpop.permute.xlu0 %486
  %488 = vrot.lane.b32.xlu0 %v436, 127
  %v489 = vpop.permute.xlu0 %488
  %490 = vrot.lane.b32.xlu0 %v437, 127
  %v491 = vpop.permute.xlu0 %490
  %492 = vrot.lane.b32.xlu0 %v438, 127
  %v493 = vpop.permute.xlu0 %492
  %494 = vrot.lane.b32.xlu0 %v439, 127
  %v495 = vpop.permute.xlu0 %494
  %v504 = vmax.f32 %v472, %v481
  %v505 = vmax.f32 %v473, %v483
  %v506 = vmax.f32 %v474, %v485
  %v507 = vmax.f32 %v475, %v487
  %v508 = vmax.f32 %v476, %v489
  %v509 = vmax.f32 %v477, %v491
  %v510 = vmax.f32 %v478, %v493
  %v511 = vmax.f32 %v479, %v495
  %512 = vrot.lane.b32.xlu0 %v456, 127
  %v513 = vpop.permute.xlu0 %512
  %514 = vrot.lane.b32.xlu0 %v457, 127
  %v515 = vpop.permute.xlu0 %514
  %516 = vrot.lane.b32.xlu0 %v458, 127
  %v517 = vpop.permute.xlu0 %516
  %518 = vrot.lane.b32.xlu0 %v459, 127
  %v519 = vpop.permute.xlu0 %518
  %520 = vrot.lane.b32.xlu0 %v460, 127
  %v521 = vpop.permute.xlu0 %520
  %522 = vrot.lane.b32.xlu0 %v461, 127
  %v523 = vpop.permute.xlu0 %522
  %524 = vrot.lane.b32.xlu0 %v462, 127
  %v525 = vpop.permute.xlu0 %524
  %526 = vrot.lane.b32.xlu0 %v463, 127
  %v527 = vpop.permute.xlu0 %526
  %v536 = vmax.f32 %v504, %v513
  %v537 = vmax.f32 %v505, %v515
  %v538 = vmax.f32 %v506, %v517
  %v539 = vmax.f32 %v507, %v519
  %v540 = vmax.f32 %v508, %v521
  %v541 = vmax.f32 %v509, %v523
  %v542 = vmax.f32 %v510, %v525
  %v543 = vmax.f32 %v511, %v527
  %544 = vrot.lane.b32.xlu0 %v432, 126
  %v545 = vpop.permute.xlu0 %544
  %546 = vrot.lane.b32.xlu0 %v433, 126
  %v547 = vpop.permute.xlu0 %546
  %548 = vrot.lane.b32.xlu0 %v434, 126
  %v549 = vpop.permute.xlu0 %548
  %550 = vrot.lane.b32.xlu0 %v435, 126
  %v551 = vpop.permute.xlu0 %550
  %552 = vrot.lane.b32.xlu0 %v436, 126
  %v553 = vpop.permute.xlu0 %552
  %554 = vrot.lane.b32.xlu0 %v437, 126
  %v555 = vpop.permute.xlu0 %554
  %556 = vrot.lane.b32.xlu0 %v438, 126
  %v557 = vpop.permute.xlu0 %556
  %558 = vrot.lane.b32.xlu0 %v439, 126
  %v559 = vpop.permute.xlu0 %558
  %v568 = vmax.f32 %v536, %v545
  %v569 = vmax.f32 %v537, %v547
  %v570 = vmax.f32 %v538, %v549
  %v571 = vmax.f32 %v539, %v551
  %v572 = vmax.f32 %v540, %v553
  %v573 = vmax.f32 %v541, %v555
  %v574 = vmax.f32 %v542, %v557
  %v575 = vmax.f32 %v543, %v559
  %v576 = vrot.slane %v8, 2
  %v577 = vrot.slane %v9, 2
  %v578 = vrot.slane %v10, 2
  %v579 = vrot.slane %v11, 2
  %v580 = vrot.slane %v12, 2
  %v581 = vrot.slane %v13, 2
  %v582 = vrot.slane %v14, 2
  %v583 = vrot.slane %v15, 2
  %v592 = vmax.f32 %v568, %v576
  %v593 = vmax.f32 %v569, %v577
  %v594 = vmax.f32 %v570, %v578
  %v595 = vmax.f32 %v571, %v579
  %v596 = vmax.f32 %v572, %v580
  %v597 = vmax.f32 %v573, %v581
  %v598 = vmax.f32 %v574, %v582
  %v599 = vmax.f32 %v575, %v583
  %v600 = vrot.slane %v16, 2
  %v601 = vrot.slane %v17, 2
  %v602 = vrot.slane %v18, 2
  %v603 = vrot.slane %v19, 2
  %v604 = vrot.slane %v20, 2
  %v605 = vrot.slane %v21, 2
  %v606 = vrot.slane %v22, 2
  %v607 = vrot.slane %v23, 2
  %v616 = vmax.f32 %v592, %v600
  %v617 = vmax.f32 %v593, %v601
  %v618 = vmax.f32 %v594, %v602
  %v619 = vmax.f32 %v595, %v603
  %v620 = vmax.f32 %v596, %v604
  %v621 = vmax.f32 %v597, %v605
  %v622 = vmax.f32 %v598, %v606
  %v623 = vmax.f32 %v599, %v607
  %624 = vrot.lane.b32.xlu0 %v576, 127
  %v625 = vpop.permute.xlu0 %624
  %626 = vrot.lane.b32.xlu0 %v577, 127
  %v627 = vpop.permute.xlu0 %626
  %628 = vrot.lane.b32.xlu0 %v578, 127
  %v629 = vpop.permute.xlu0 %628
  %630 = vrot.lane.b32.xlu0 %v579, 127
  %v631 = vpop.permute.xlu0 %630
  %632 = vrot.lane.b32.xlu0 %v580, 127
  %v633 = vpop.permute.xlu0 %632
  %634 = vrot.lane.b32.xlu0 %v581, 127
  %v635 = vpop.permute.xlu0 %634
  %636 = vrot.lane.b32.xlu0 %v582, 127
  %v637 = vpop.permute.xlu0 %636
  %638 = vrot.lane.b32.xlu0 %v583, 127
  %v639 = vpop.permute.xlu0 %638
  %v648 = vmax.f32 %v616, %v625
  %v649 = vmax.f32 %v617, %v627
  %v650 = vmax.f32 %v618, %v629
  %v651 = vmax.f32 %v619, %v631
  %v652 = vmax.f32 %v620, %v633
  %v653 = vmax.f32 %v621, %v635
  %v654 = vmax.f32 %v622, %v637
  %v655 = vmax.f32 %v623, %v639
  %656 = vrot.lane.b32.xlu0 %v600, 127
  %v657 = vpop.permute.xlu0 %656
  %658 = vrot.lane.b32.xlu0 %v601, 127
  %v659 = vpop.permute.xlu0 %658
  %660 = vrot.lane.b32.xlu0 %v602, 127
  %v661 = vpop.permute.xlu0 %660
  %662 = vrot.lane.b32.xlu0 %v603, 127
  %v663 = vpop.permute.xlu0 %662
  %664 = vrot.lane.b32.xlu0 %v604, 127
  %v665 = vpop.permute.xlu0 %664
  %666 = vrot.lane.b32.xlu0 %v605, 127
  %v667 = vpop.permute.xlu0 %666
  %668 = vrot.lane.b32.xlu0 %v606, 127
  %v669 = vpop.permute.xlu0 %668
  %670 = vrot.lane.b32.xlu0 %v607, 127
  %v671 = vpop.permute.xlu0 %670
  %v680 = vmax.f32 %v648, %v657
  %v681 = vmax.f32 %v649, %v659
  %v682 = vmax.f32 %v650, %v661
  %v683 = vmax.f32 %v651, %v663
  %v684 = vmax.f32 %v652, %v665
  %v685 = vmax.f32 %v653, %v667
  %v686 = vmax.f32 %v654, %v669
  %v687 = vmax.f32 %v655, %v671
  %688 = vrot.lane.b32.xlu0 %v576, 126
  %v689 = vpop.permute.xlu0 %688
  %690 = vrot.lane.b32.xlu0 %v577, 126
  %v691 = vpop.permute.xlu0 %690
  %692 = vrot.lane.b32.xlu0 %v578, 126
  %v693 = vpop.permute.xlu0 %692
  %694 = vrot.lane.b32.xlu0 %v579, 126
  %v695 = vpop.permute.xlu0 %694
  %696 = vrot.lane.b32.xlu0 %v580, 126
  %v697 = vpop.permute.xlu0 %696
  %698 = vrot.lane.b32.xlu0 %v581, 126
  %v699 = vpop.permute.xlu0 %698
  %700 = vrot.lane.b32.xlu0 %v582, 126
  %v701 = vpop.permute.xlu0 %700
  %702 = vrot.lane.b32.xlu0 %v583, 126
  %v703 = vpop.permute.xlu0 %702
  %v712 = vmax.f32 %v680, %v689
  %v713 = vmax.f32 %v681, %v691
  %v714 = vmax.f32 %v682, %v693
  %v715 = vmax.f32 %v683, %v695
  %v716 = vmax.f32 %v684, %v697
  %v717 = vmax.f32 %v685, %v699
  %v718 = vmax.f32 %v686, %v701
  %v719 = vmax.f32 %v687, %v703
  %vm720 = vcmask 46080
  %721 = vst.msk [vmem:[%s1] sm:$0x3f] %vm720, %v712
  %722 = vst.msk [vmem:[%s1 + $0x8] sm:$0x3f] %vm720, %v713
  %723 = vst.msk [vmem:[%s1 + $0x10] sm:$0x3f] %vm720, %v714
  %724 = vst.msk [vmem:[%s1 + $0x18] sm:$0x3f] %vm720, %v715
  %725 = vst.msk [vmem:[%s1 + $0x20] sm:$0x3f] %vm720, %v716
  %726 = vst.msk [vmem:[%s1 + $0x28] sm:$0x3f] %vm720, %v717
  %727 = vst.msk [vmem:[%s1 + $0x30] sm:$0x3f] %vm720, %v718
  %728 = vst.msk [vmem:[%s1 + $0x38] sm:$0x3f] %vm720, %v719
  // Predicated region
  $region6: #{multi_branch_stem_m12x.14} parent=0 // pred_check
    _
  $region7: #{multi_branch_stem_m12x.14} parent=0 // pred_check_branch
    %730 = sbr.rel (0) target = $region9
  $region8: #{multi_branch_stem_m12x.14} parent=0 // pred_region
    _
  $region9: #{multi_branch_stem_m12x.14} parent=0 // pred_fallthru
    _
  // Predicated region
  $region10: #{multi_branch_stem_m12x.14} parent=0 // pred_check
    _
  $region11: #{multi_branch_stem_m12x.14} parent=0 // pred_check_branch
    %732 = sbr.rel (0) target = $region13
  $region12: #{multi_branch_stem_m12x.14} parent=0 // pred_region
    _
  $region13: #{multi_branch_stem_m12x.14} parent=0 // pred_fallthru
    _

// kernel: multi_branch_stem_m12x.13
$region0: #{multi_branch_stem_m12x.13}
  #allocation0 [shape = 'u32[]', space=smem, size = 0x4, offset = 0x4, fixed_abs, tag = 'smem constant byte address 0x4 - core index']
  #allocation1 [shape = 'u32[144,128]{1,0:T(1,128)}', space=vmem, size = 0x12000, scoped, tag = 'internal scratch']
  %s0 = inlined_call_operand.vmem [shape: f32[4,8,7,7], index: 0, kind: input, shape index: {}]
  %s1 = inlined_call_operand.vmem [shape: f32[8,6,6], index: 1, kind: output, shape index: {}]
  %s2 = sld [smem:[#allocation0]]
  $region14: #{multi_branch_stem_m12x.13} parent=0
    _
  %s4 = ssub.s32 1, %s2
  %s5 = scalar_select 0, %s4, %s2
  // Predicated region
  $region2: #{multi_branch_stem_m12x.13} parent=0 // pred_check
    _
  $region3: #{multi_branch_stem_m12x.13} parent=0 // pred_check_branch
    %7 = sbr.rel (0) target = $region5
  $region4: #{multi_branch_stem_m12x.13} parent=0 // pred_region
    _
  $region5: #{multi_branch_stem_m12x.13} parent=0 // pred_fallthru
    _
  %v8 = vld [vmem:[%s0] sm:$0x7f]
  %v9 = vld [vmem:[%s0 + $0x8] sm:$0x7f]
  %v10 = vld [vmem:[%s0 + $0x10] sm:$0x7f]
  %v11 = vld [vmem:[%s0 + $0x18] sm:$0x7f]
  %v12 = vld [vmem:[%s0 + $0x20] sm:$0x7f]
  %v13 = vld [vmem:[%s0 + $0x28] sm:$0x7f]
  %v14 = vld [vmem:[%s0 + $0x30] sm:$0x7f]
  %v15 = vld [vmem:[%s0 + $0x38] sm:$0x7f]
  %v16 = vld [vmem:[%s0 + $0x40] sm:$0x7f]
  %v17 = vld [vmem:[%s0 + $0x48] sm:$0x7f]
  %v18 = vld [vmem:[%s0 + $0x50] sm:$0x7f]
  %v19 = vld [vmem:[%s0 + $0x58] sm:$0x7f]
  %v20 = vld [vmem:[%s0 + $0x60] sm:$0x7f]
  %v21 = vld [vmem:[%s0 + $0x68] sm:$0x7f]
  %v22 = vld [vmem:[%s0 + $0x70] sm:$0x7f]
  %v23 = vld [vmem:[%s0 + $0x78] sm:$0x7f]
  %v24 = vld [vmem:[%s0 + $0x80] sm:$0x7f]
  %v25 = vld [vmem:[%s0 + $0x88] sm:$0x7f]
  %v26 = vld [vmem:[%s0 + $0x90] sm:$0x7f]
  %v27 = vld [vmem:[%s0 + $0x98] sm:$0x7f]
  %v28 = vld [vmem:[%s0 + $0xa0] sm:$0x7f]
  %v29 = vld [vmem:[%s0 + $0xa8] sm:$0x7f]
  %v30 = vld [vmem:[%s0 + $0xb0] sm:$0x7f]
  %v31 = vld [vmem:[%s0 + $0xb8] sm:$0x7f]
  %v32 = vld [vmem:[%s0 + $0xc0] sm:$0x7f]
  %v33 = vld [vmem:[%s0 + $0xc8] sm:$0x7f]
  %v34 = vld [vmem:[%s0 + $0xd0] sm:$0x7f]
  %v35 = vld [vmem:[%s0 + $0xd8] sm:$0x7f]
  %v36 = vld [vmem:[%s0 + $0xe0] sm:$0x7f]
  %v37 = vld [vmem:[%s0 + $0xe8] sm:$0x7f]
  %v38 = vld [vmem:[%s0 + $0xf0] sm:$0x7f]
  %v39 = vld [vmem:[%s0 + $0xf8] sm:$0x7f]
  %v40 = vmax.f32 %v8, %v16
  %v41 = vmax.f32 %v9, %v17
  %v42 = vmax.f32 %v10, %v18
  %v43 = vmax.f32 %v11, %v19
  %v44 = vmax.f32 %v12, %v20
  %v45 = vmax.f32 %v13, %v21
  %v46 = vmax.f32 %v14, %v22
  %v47 = vmax.f32 %v15, %v23
  %56 = vrot.lane.b32.xlu0 %v8, 127
  %v57 = vpop.permute.xlu0 %56
  %58 = vrot.lane.b32.xlu0 %v9, 127
  %v59 = vpop.permute.xlu0 %58
  %60 = vrot.lane.b32.xlu0 %v10, 127
  %v61 = vpop.permute.xlu0 %60
  %62 = vrot.lane.b32.xlu0 %v11, 127
  %v63 = vpop.permute.xlu0 %62
  %64 = vrot.lane.b32.xlu0 %v12, 127
  %v65 = vpop.permute.xlu0 %64
  %66 = vrot.lane.b32.xlu0 %v13, 127
  %v67 = vpop.permute.xlu0 %66
  %68 = vrot.lane.b32.xlu0 %v14, 127
  %v69 = vpop.permute.xlu0 %68
  %70 = vrot.lane.b32.xlu0 %v15, 127
  %v71 = vpop.permute.xlu0 %70
  %v80 = vmax.f32 %v40, %v57
  %v81 = vmax.f32 %v41, %v59
  %v82 = vmax.f32 %v42, %v61
  %v83 = vmax.f32 %v43, %v63
  %v84 = vmax.f32 %v44, %v65
  %v85 = vmax.f32 %v45, %v67
  %v86 = vmax.f32 %v46, %v69
  %v87 = vmax.f32 %v47, %v71
  %v88 = vmax.f32 %v80, %v24
  %v89 = vmax.f32 %v81, %v25
  %v90 = vmax.f32 %v82, %v26
  %v91 = vmax.f32 %v83, %v27
  %v92 = vmax.f32 %v84, %v28
  %v93 = vmax.f32 %v85, %v29
  %v94 = vmax.f32 %v86, %v30
  %v95 = vmax.f32 %v87, %v31
  %v96 = vmax.f32 %v88, %v32
  %v97 = vmax.f32 %v89, %v33
  %v98 = vmax.f32 %v90, %v34
  %v99 = vmax.f32 %v91, %v35
  %v100 = vmax.f32 %v92, %v36
  %v101 = vmax.f32 %v93, %v37
  %v102 = vmax.f32 %v94, %v38
  %v103 = vmax.f32 %v95, %v39
  %112 = vrot.lane.b32.xlu0 %v24, 127
  %v113 = vpop.permute.xlu0 %112
  %114 = vrot.lane.b32.xlu0 %v25, 127
  %v115 = vpop.permute.xlu0 %114
  %116 = vrot.lane.b32.xlu0 %v26, 127
  %v117 = vpop.permute.xlu0 %116
  %118 = vrot.lane.b32.xlu0 %v27, 127
  %v119 = vpop.permute.xlu0 %118
  %120 = vrot.lane.b32.xlu0 %v28, 127
  %v121 = vpop.permute.xlu0 %120
  %122 = vrot.lane.b32.xlu0 %v29, 127
  %v123 = vpop.permute.xlu0 %122
  %124 = vrot.lane.b32.xlu0 %v30, 127
  %v125 = vpop.permute.xlu0 %124
  %126 = vrot.lane.b32.xlu0 %v31, 127
  %v127 = vpop.permute.xlu0 %126
  %v136 = vmax.f32 %v96, %v113
  %v137 = vmax.f32 %v97, %v115
  %v138 = vmax.f32 %v98, %v117
  %v139 = vmax.f32 %v99, %v119
  %v140 = vmax.f32 %v100, %v121
  %v141 = vmax.f32 %v101, %v123
  %v142 = vmax.f32 %v102, %v125
  %v143 = vmax.f32 %v103, %v127
  %v144 = vrot.slane %v8, 1
  %v145 = vrot.slane %v9, 1
  %v146 = vrot.slane %v10, 1
  %v147 = vrot.slane %v11, 1
  %v148 = vrot.slane %v12, 1
  %v149 = vrot.slane %v13, 1
  %v150 = vrot.slane %v14, 1
  %v151 = vrot.slane %v15, 1
  %v160 = vmax.f32 %v136, %v144
  %v161 = vmax.f32 %v137, %v145
  %v162 = vmax.f32 %v138, %v146
  %v163 = vmax.f32 %v139, %v147
  %v164 = vmax.f32 %v140, %v148
  %v165 = vmax.f32 %v141, %v149
  %v166 = vmax.f32 %v142, %v150
  %v167 = vmax.f32 %v143, %v151
  %v176 = vrot.slane %v16, 1
  %v177 = vrot.slane %v17, 1
  %v178 = vrot.slane %v18, 1
  %v179 = vrot.slane %v19, 1
  %v180 = vrot.slane %v20, 1
  %v181 = vrot.slane %v21, 1
  %v182 = vrot.slane %v22, 1
  %v183 = vrot.slane %v23, 1
  %v192 = vmax.f32 %v160, %v176
  %v193 = vmax.f32 %v161, %v177
  %v194 = vmax.f32 %v162, %v178
  %v195 = vmax.f32 %v163, %v179
  %v196 = vmax.f32 %v164, %v180
  %v197 = vmax.f32 %v165, %v181
  %v198 = vmax.f32 %v166, %v182
  %v199 = vmax.f32 %v167, %v183
  %200 = vrot.lane.b32.xlu0 %v144, 127
  %v201 = vpop.permute.xlu0 %200
  %202 = vrot.lane.b32.xlu0 %v145, 127
  %v203 = vpop.permute.xlu0 %202
  %204 = vrot.lane.b32.xlu0 %v146, 127
  %v205 = vpop.permute.xlu0 %204
  %206 = vrot.lane.b32.xlu0 %v147, 127
  %v207 = vpop.permute.xlu0 %206
  %208 = vrot.lane.b32.xlu0 %v148, 127
  %v209 = vpop.permute.xlu0 %208
  %210 = vrot.lane.b32.xlu0 %v149, 127
  %v211 = vpop.permute.xlu0 %210
  %212 = vrot.lane.b32.xlu0 %v150, 127
  %v213 = vpop.permute.xlu0 %212
  %214 = vrot.lane.b32.xlu0 %v151, 127
  %v215 = vpop.permute.xlu0 %214
  %v224 = vmax.f32 %v192, %v201
  %v225 = vmax.f32 %v193, %v203
  %v226 = vmax.f32 %v194, %v205
  %v227 = vmax.f32 %v195, %v207
  %v228 = vmax.f32 %v196, %v209
  %v229 = vmax.f32 %v197, %v211
  %v230 = vmax.f32 %v198, %v213
  %v231 = vmax.f32 %v199, %v215
  %vm232 = vcmask 46080
  %233 = vst.msk [vmem:[%s1] sm:$0x3f] %vm232, %v224
  %234 = vst.msk [vmem:[%s1 + $0x8] sm:$0x3f] %vm232, %v225
  %235 = vst.msk [vmem:[%s1 + $0x10] sm:$0x3f] %vm232, %v226
  %236 = vst.msk [vmem:[%s1 + $0x18] sm:$0x3f] %vm232, %v227
  %237 = vst.msk [vmem:[%s1 + $0x20] sm:$0x3f] %vm232, %v228
  %238 = vst.msk [vmem:[%s1 + $0x28] sm:$0x3f] %vm232, %v229
  %239 = vst.msk [vmem:[%s1 + $0x30] sm:$0x3f] %vm232, %v230
  %240 = vst.msk [vmem:[%s1 + $0x38] sm:$0x3f] %vm232, %v231
  // Predicated region
  $region6: #{multi_branch_stem_m12x.13} parent=0 // pred_check
    _
  $region7: #{multi_branch_stem_m12x.13} parent=0 // pred_check_branch
    %242 = sbr.rel (0) target = $region9
  $region8: #{multi_branch_stem_m12x.13} parent=0 // pred_region
    _
  $region9: #{multi_branch_stem_m12x.13} parent=0 // pred_fallthru
    _
  // Predicated region
  $region10: #{multi_branch_stem_m12x.13} parent=0 // pred_check
    _
  $region11: #{multi_branch_stem_m12x.13} parent=0 // pred_check_branch
    %244 = sbr.rel (0) target = $region13
  $region12: #{multi_branch_stem_m12x.13} parent=0 // pred_region
    _
  $region13: #{multi_branch_stem_m12x.13} parent=0 // pred_fallthru
    _

// kernel: multi_branch_stem_m12x.15
$region0: #{multi_branch_stem_m12x.15}
  #allocation0 [shape = 'u32[]', space=smem, size = 0x4, offset = 0x4, fixed_abs, tag = 'smem constant byte address 0x4 - core index']
  #allocation1 [shape = 'u32[144,128]{1,0:T(1,128)}', space=vmem, size = 0x12000, scoped, tag = 'internal scratch']
  %s0 = inlined_call_operand.vmem [shape: bf16[8,72], index: 0, kind: input, shape index: {}]
  %s1 = inlined_call_operand.vmem [shape: bf16[72,128], index: 1, kind: input, shape index: {}]
  %s2 = inlined_call_operand.vmem [shape: f32[8,1], index: 2, kind: input, shape index: {}]
  %s3 = inlined_call_operand.vmem [shape: f32[8,128], index: 3, kind: output, shape index: {}]
  %s4 = sld [smem:[#allocation0]]
  $region22: #{multi_branch_stem_m12x.15} parent=0
    _
  %s6 = ssub.s32 1, %s4
  %s7 = scalar_select 0, %s6, %s4
  // Predicated region
  $region2: #{multi_branch_stem_m12x.15} parent=0 // pred_check
    _
  $region3: #{multi_branch_stem_m12x.15} parent=0 // pred_check_branch
    %9 = sbr.rel (0) target = $region5
  $region4: #{multi_branch_stem_m12x.15} parent=0 // pred_region
    _
  $region5: #{multi_branch_stem_m12x.15} parent=0 // pred_fallthru
    _
  // Predicated region
  $region6: #{multi_branch_stem_m12x.15} parent=0 // pred_check
    _
  $region7: #{multi_branch_stem_m12x.15} parent=0 // pred_check_branch
    %11 = sbr.rel (0) target = $region9
  $region8: #{multi_branch_stem_m12x.15} parent=0 // pred_region
    _
  $region9: #{multi_branch_stem_m12x.15} parent=0 // pred_fallthru
    _
  // Predicated region
  $region10: #{multi_branch_stem_m12x.15} parent=0 // pred_check
    _
  $region11: #{multi_branch_stem_m12x.15} parent=0 // pred_check_branch
    %13 = sbr.rel (0) target = $region13
  $region12: #{multi_branch_stem_m12x.15} parent=0 // pred_region
    _
  $region13: #{multi_branch_stem_m12x.15} parent=0 // pred_fallthru
    _
  %v15 = vld [vmem:[%s0] sm:$0xf]
  %v16 = vld [vmem:[%s1] sm:$0xf]
  %v17 = vld [vmem:[%s1 + $0x4] sm:$0xf]
  %v18 = vld [vmem:[%s1 + $0x8] sm:$0xf]
  %v19 = vld [vmem:[%s1 + $0xc] sm:$0xf]
  %v20 = vld [vmem:[%s1 + $0x10] sm:$0xf]
  %v21 = vld [vmem:[%s1 + $0x14] sm:$0xf]
  %v22 = vld [vmem:[%s1 + $0x18] sm:$0xf]
  %v23 = vld [vmem:[%s1 + $0x1c] sm:$0xf]
  %v24 = vld [vmem:[%s1 + $0x20] sm:$0xf]
  %v25 = vld [vmem:[%s2] sm:$0xff]
  %27 = vset.pattern.permute.xlu0 0
  %28 = vperm.xlu0 %27, %v25
  %v29 = vpop.permute.xlu0 %28
  %v40 = vunpack.c.l.b16 %v16
  %v41 = vunpack.c.l.b16 %v17
  %v42 = vunpack.c.l.b16 %v18
  %v43 = vunpack.c.l.b16 %v19
  %v44 = vunpack.c.l.b16 %v20
  %v45 = vunpack.c.l.b16 %v21
  %v46 = vunpack.c.l.b16 %v22
  %v47 = vunpack.c.l.b16 %v23
  %v48 = vunpack.c.l.b16 %v24
  %v49 = vpack.c.b16 %v41, %v40
  %v50 = vpack.c.b16 %v43, %v42
  %v51 = vpack.c.b16 %v45, %v44
  %v52 = vpack.c.b16 %v47, %v46
  %v53 = vpack.c.b16 %v48, %v48
  %vm58 = vcmask 588800
  %v60 = vsel %vm58, %v15, 0
  %vm62 = vcmask 1043456
  %v64 = vsel %vm62, %v53, 0
  %66 = vmatprep.subr.bf16.mxu0 0
  %67 = vmatpush1.bf16.msra.mxu0 %v49
  %68 = vmatprep.subr.bf16.mxu0 0
  %69 = vmatpush1.bf16.msra.mxu0 %v50
  %70 = vmatprep.subr.bf16.mxu0 0
  %71 = vmatpush1.bf16.msra.mxu0 %v51
  %72 = vmatprep.subr.bf16.mxu0 0
  %73 = vmatpush1.bf16.msra.mxu0 %v52
  %74 = vmatprep.subr.bf16.mxu0 0
  %75 = vmatpush1.bf16.msra.mxu0 %v64
  %76 = vmatprep.subr.bf16.mxu0 0
  %77 = vmatpush1.bf16.msra.mxu0 0
  %78 = vmatprep.subr.bf16.mxu0 0
  %79 = vmatpush1.bf16.msra.mxu0 0
  %80 = vmatprep.subr.bf16.mxu0 0
  %81 = vmatpush1.bf16.msra.mxu0 0
  %82 = vmatprep.subr.bf16.mxu0 0
  %83 = vmatpush1.bf16.msra.mxu0 0
  %84 = vmatprep.subr.bf16.mxu0 0
  %85 = vmatpush1.bf16.msra.mxu0 0
  %86 = vmatprep.subr.bf16.mxu0 0
  %87 = vmatpush1.bf16.msra.mxu0 0
  %88 = vmatprep.subr.bf16.mxu0 0
  %89 = vmatpush1.bf16.msra.mxu0 0
  %90 = vmatprep.subr.bf16.mxu0 0
  %91 = vmatpush1.bf16.msra.mxu0 0
  %92 = vmatprep.subr.bf16.mxu0 0
  %93 = vmatpush1.bf16.msra.mxu0 0
  %94 = vmatprep.subr.bf16.mxu0 0
  %95 = vmatpush1.bf16.msra.mxu0 0
  %96 = vmatprep.subr.bf16.mxu0 0
  %97 = vmatpush1.bf16.msra.mxu0 0
  %98 = vmatprep.mubr.bf16.mxu0 0
  %99 = vmatmul.mubr.bf16.gmra.mrb[0].mxu0 %v60
  %v100 = vpop.f32.mrb[0].mxu0
  %v101 = vadd.f32 %v29, %v100
  %v102 = vpop.f32.mrb[0].mxu0
  %v103 = vpop.f32.mrb[0].mxu0
  %v104 = vpop.f32.mrb[0].mxu0
  %105 = vdwg.mxu0
  %vm106 = vcmp.gt.f32.partialorder %v101, 0.0
  %v107 = vmul.f32 %v101, 0.01
  %v108 = vsel %vm106, %v101, %v107
  %109 = vst [vmem:[%s3] sm:$0xff] %v108
  // Predicated region
  $region14: #{multi_branch_stem_m12x.15} parent=0 // pred_check
    _
  $region15: #{multi_branch_stem_m12x.15} parent=0 // pred_check_branch
    %111 = sbr.rel (0) target = $region17
  $region16: #{multi_branch_stem_m12x.15} parent=0 // pred_region
    _
  $region17: #{multi_branch_stem_m12x.15} parent=0 // pred_fallthru
    _
  // Predicated region
  $region18: #{multi_branch_stem_m12x.15} parent=0 // pred_check
    _
  $region19: #{multi_branch_stem_m12x.15} parent=0 // pred_check_branch
    %113 = sbr.rel (0) target = $region21
  $region20: #{multi_branch_stem_m12x.15} parent=0 // pred_region
    _
  $region21: #{multi_branch_stem_m12x.15} parent=0 // pred_fallthru
    _

// kernel: multi_branch_stem_m12x.10
$region0: #{multi_branch_stem_m12x.10}
  #allocation0 [shape = 'u32[]', space=smem, size = 0x4, offset = 0x4, fixed_abs, tag = 'smem constant byte address 0x4 - core index']
  #allocation1 [shape = 'u32[144,128]{1,0:T(1,128)}', space=vmem, size = 0x12000, scoped, tag = 'internal scratch']
  %s0 = inlined_call_operand.vmem [shape: f32[4,8,4,4], index: 0, kind: input, shape index: {}]
  %s1 = inlined_call_operand.vmem [shape: f32[8,4,4], index: 1, kind: output, shape index: {}]
  %s2 = sld [smem:[#allocation0]]
  $region14: #{multi_branch_stem_m12x.10} parent=0
    _
  %s4 = ssub.s32 1, %s2
  %s5 = scalar_select 0, %s4, %s2
  // Predicated region
  $region2: #{multi_branch_stem_m12x.10} parent=0 // pred_check
    _
  $region3: #{multi_branch_stem_m12x.10} parent=0 // pred_check_branch
    %7 = sbr.rel (0) target = $region5
  $region4: #{multi_branch_stem_m12x.10} parent=0 // pred_region
    _
  $region5: #{multi_branch_stem_m12x.10} parent=0 // pred_fallthru
    _
  %v8 = vld [vmem:[%s0] sm:$0xf]
  %v9 = vld [vmem:[%s0 + $0x4] sm:$0xf]
  %v10 = vld [vmem:[%s0 + $0x8] sm:$0xf]
  %v11 = vld [vmem:[%s0 + $0xc] sm:$0xf]
  %v12 = vld [vmem:[%s0 + $0x10] sm:$0xf]
  %v13 = vld [vmem:[%s0 + $0x14] sm:$0xf]
  %v14 = vld [vmem:[%s0 + $0x18] sm:$0xf]
  %v15 = vld [vmem:[%s0 + $0x1c] sm:$0xf]
  %v16 = vld [vmem:[%s0 + $0x20] sm:$0xf]
  %v17 = vld [vmem:[%s0 + $0x24] sm:$0xf]
  %v18 = vld [vmem:[%s0 + $0x28] sm:$0xf]
  %v19 = vld [vmem:[%s0 + $0x2c] sm:$0xf]
  %v20 = vld [vmem:[%s0 + $0x30] sm:$0xf]
  %v21 = vld [vmem:[%s0 + $0x34] sm:$0xf]
  %v22 = vld [vmem:[%s0 + $0x38] sm:$0xf]
  %v23 = vld [vmem:[%s0 + $0x3c] sm:$0xf]
  %v24 = vld [vmem:[%s0 + $0x40] sm:$0xf]
  %v25 = vld [vmem:[%s0 + $0x44] sm:$0xf]
  %v26 = vld [vmem:[%s0 + $0x48] sm:$0xf]
  %v27 = vld [vmem:[%s0 + $0x4c] sm:$0xf]
  %v28 = vld [vmem:[%s0 + $0x50] sm:$0xf]
  %v29 = vld [vmem:[%s0 + $0x54] sm:$0xf]
  %v30 = vld [vmem:[%s0 + $0x58] sm:$0xf]
  %v31 = vld [vmem:[%s0 + $0x5c] sm:$0xf]
  %v32 = vld [vmem:[%s0 + $0x60] sm:$0xf]
  %v33 = vld [vmem:[%s0 + $0x64] sm:$0xf]
  %v34 = vld [vmem:[%s0 + $0x68] sm:$0xf]
  %v35 = vld [vmem:[%s0 + $0x6c] sm:$0xf]
  %v36 = vld [vmem:[%s0 + $0x70] sm:$0xf]
  %v37 = vld [vmem:[%s0 + $0x74] sm:$0xf]
  %v38 = vld [vmem:[%s0 + $0x78] sm:$0xf]
  %v39 = vld [vmem:[%s0 + $0x7c] sm:$0xf]
  %v40 = vadd.f32 %v8, %v16
  %v41 = vadd.f32 %v9, %v17
  %v42 = vadd.f32 %v10, %v18
  %v43 = vadd.f32 %v11, %v19
  %v44 = vadd.f32 %v12, %v20
  %v45 = vadd.f32 %v13, %v21
  %v46 = vadd.f32 %v14, %v22
  %v47 = vadd.f32 %v15, %v23
  %v48 = vadd.f32 %v40, %v24
  %v49 = vadd.f32 %v41, %v25
  %v50 = vadd.f32 %v42, %v26
  %v51 = vadd.f32 %v43, %v27
  %v52 = vadd.f32 %v44, %v28
  %v53 = vadd.f32 %v45, %v29
  %v54 = vadd.f32 %v46, %v30
  %v55 = vadd.f32 %v47, %v31
  %v56 = vadd.f32 %v48, %v32
  %v57 = vadd.f32 %v49, %v33
  %v58 = vadd.f32 %v50, %v34
  %v59 = vadd.f32 %v51, %v35
  %v60 = vadd.f32 %v52, %v36
  %v61 = vadd.f32 %v53, %v37
  %v62 = vadd.f32 %v54, %v38
  %v63 = vadd.f32 %v55, %v39
  %v64 = vmul.f32 %v56, 0.25
  %v65 = vmul.f32 %v57, 0.25
  %v66 = vmul.f32 %v58, 0.25
  %v67 = vmul.f32 %v59, 0.25
  %v68 = vmul.f32 %v60, 0.25
  %v69 = vmul.f32 %v61, 0.25
  %v70 = vmul.f32 %v62, 0.25
  %v71 = vmul.f32 %v63, 0.25
  %vm72 = vcmask 27648
  %73 = vst.msk [vmem:[%s1] sm:$0xf] %vm72, %v64
  %74 = vst.msk [vmem:[%s1 + $0x4] sm:$0xf] %vm72, %v65
  %75 = vst.msk [vmem:[%s1 + $0x8] sm:$0xf] %vm72, %v66
  %76 = vst.msk [vmem:[%s1 + $0xc] sm:$0xf] %vm72, %v67
  %77 = vst.msk [vmem:[%s1 + $0x10] sm:$0xf] %vm72, %v68
  %78 = vst.msk [vmem:[%s1 + $0x14] sm:$0xf] %vm72, %v69
  %79 = vst.msk [vmem:[%s1 + $0x18] sm:$0xf] %vm72, %v70
  %80 = vst.msk [vmem:[%s1 + $0x1c] sm:$0xf] %vm72, %v71
  // Predicated region
  $region6: #{multi_branch_stem_m12x.10} parent=0 // pred_check
    _
  $region7: #{multi_branch_stem_m12x.10} parent=0 // pred_check_branch
    %82 = sbr.rel (0) target = $region9
  $region8: #{multi_branch_stem_m12x.10} parent=0 // pred_region
    _
  $region9: #{multi_branch_stem_m12x.10} parent=0 // pred_fallthru
    _
  // Predicated region
  $region10: #{multi_branch_stem_m12x.10} parent=0 // pred_check
    _
  $region11: #{multi_branch_stem_m12x.10} parent=0 // pred_check_branch
    %84 = sbr.rel (0) target = $region13
  $region12: #{multi_branch_stem_m12x.10} parent=0 // pred_region
    _
  $region13: #{multi_branch_stem_m12x.10} parent=0 // pred_fallthru
    _

// kernel: multi_branch_stem_m12x.16
$region0: #{multi_branch_stem_m12x.16}
  #allocation0 [shape = 'u32[]', space=smem, size = 0x4, offset = 0x4, fixed_abs, tag = 'smem constant byte address 0x4 - core index']
  #allocation1 [shape = 'u32[144,128]{1,0:T(1,128)}', space=vmem, size = 0x12000, scoped, tag = 'internal scratch']
  %s0 = inlined_call_operand.vmem [shape: bf16[8,200], index: 0, kind: input, shape index: {}]
  %s1 = inlined_call_operand.vmem [shape: bf16[200,128], index: 1, kind: input, shape index: {}]
  %s2 = inlined_call_operand.vmem [shape: f32[8,1], index: 2, kind: input, shape index: {}]
  %s3 = inlined_call_operand.vmem [shape: f32[8,128], index: 3, kind: output, shape index: {}]
  %s4 = sld [smem:[#allocation0]]
  $region22: #{multi_branch_stem_m12x.16} parent=0
    _
  %s6 = ssub.s32 1, %s4
  %s7 = scalar_select 0, %s6, %s4
  // Predicated region
  $region2: #{multi_branch_stem_m12x.16} parent=0 // pred_check
    _
  $region3: #{multi_branch_stem_m12x.16} parent=0 // pred_check_branch
    %9 = sbr.rel (0) target = $region5
  $region4: #{multi_branch_stem_m12x.16} parent=0 // pred_region
    _
  $region5: #{multi_branch_stem_m12x.16} parent=0 // pred_fallthru
    _
  // Predicated region
  $region6: #{multi_branch_stem_m12x.16} parent=0 // pred_check
    _
  $region7: #{multi_branch_stem_m12x.16} parent=0 // pred_check_branch
    %11 = sbr.rel (0) target = $region9
  $region8: #{multi_branch_stem_m12x.16} parent=0 // pred_region
    _
  $region9: #{multi_branch_stem_m12x.16} parent=0 // pred_fallthru
    _
  // Predicated region
  $region10: #{multi_branch_stem_m12x.16} parent=0 // pred_check
    _
  $region11: #{multi_branch_stem_m12x.16} parent=0 // pred_check_branch
    %13 = sbr.rel (0) target = $region13
  $region12: #{multi_branch_stem_m12x.16} parent=0 // pred_region
    _
  $region13: #{multi_branch_stem_m12x.16} parent=0 // pred_fallthru
    _
  %v15 = vld [vmem:[%s0] sm:$0xff]
  %v16 = vld [vmem:[%s1] sm:$0xf]
  %v17 = vld [vmem:[%s1 + $0x4] sm:$0xf]
  %v18 = vld [vmem:[%s1 + $0x8] sm:$0xf]
  %v19 = vld [vmem:[%s1 + $0xc] sm:$0xf]
  %v20 = vld [vmem:[%s1 + $0x10] sm:$0xf]
  %v21 = vld [vmem:[%s1 + $0x14] sm:$0xf]
  %v22 = vld [vmem:[%s1 + $0x18] sm:$0xf]
  %v23 = vld [vmem:[%s1 + $0x1c] sm:$0xf]
  %v24 = vld [vmem:[%s1 + $0x20] sm:$0xf]
  %v25 = vld [vmem:[%s1 + $0x24] sm:$0xf]
  %v26 = vld [vmem:[%s1 + $0x28] sm:$0xf]
  %v27 = vld [vmem:[%s1 + $0x2c] sm:$0xf]
  %v28 = vld [vmem:[%s1 + $0x30] sm:$0xf]
  %v29 = vld [vmem:[%s1 + $0x34] sm:$0xf]
  %v30 = vld [vmem:[%s1 + $0x38] sm:$0xf]
  %v31 = vld [vmem:[%s1 + $0x3c] sm:$0xf]
  %v32 = vld [vmem:[%s1 + $0x40] sm:$0xf]
  %v33 = vld [vmem:[%s1 + $0x44] sm:$0xf]
  %v34 = vld [vmem:[%s1 + $0x48] sm:$0xf]
  %v35 = vld [vmem:[%s1 + $0x4c] sm:$0xf]
  %v36 = vld [vmem:[%s1 + $0x50] sm:$0xf]
  %v37 = vld [vmem:[%s1 + $0x54] sm:$0xf]
  %v38 = vld [vmem:[%s1 + $0x58] sm:$0xf]
  %v39 = vld [vmem:[%s1 + $0x5c] sm:$0xf]
  %v40 = vld [vmem:[%s1 + $0x60] sm:$0xf]
  %v41 = vld [vmem:[%s2] sm:$0xff]
  %43 = vset.pattern.permute.xlu0 0
  %44 = vperm.xlu0 %43, %v41
  %v45 = vpop.permute.xlu0 %44
  %v48 = vunpack.c.l.b16 %v15
  %v49 = vunpack.c.h.b16 %v15
  %v50 = vpack.c.b16 %v48, %v48
  %v51 = vpack.c.b16 %v49, %v49
  %v78 = vunpack.c.l.b16 %v16
  %v79 = vunpack.c.l.b16 %v17
  %v80 = vunpack.c.l.b16 %v18
  %v81 = vunpack.c.l.b16 %v19
  %v82 = vunpack.c.l.b16 %v20
  %v83 = vunpack.c.l.b16 %v21
  %v84 = vunpack.c.l.b16 %v22
  %v85 = vunpack.c.l.b16 %v23
  %v86 = vunpack.c.l.b16 %v24
  %v87 = vunpack.c.l.b16 %v25
  %v88 = vunpack.c.l.b16 %v26
  %v89 = vunpack.c.l.b16 %v27
  %v90 = vunpack.c.l.b16 %v28
  %v91 = vunpack.c.l.b16 %v29
  %v92 = vunpack.c.l.b16 %v30
  %v93 = vunpack.c.l.b16 %v31
  %v94 = vunpack.c.l.b16 %v32
  %v95 = vunpack.c.l.b16 %v33
  %v96 = vunpack.c.l.b16 %v34
  %v97 = vunpack.c.l.b16 %v35
  %v98 = vunpack.c.l.b16 %v36
  %v99 = vunpack.c.l.b16 %v37
  %v100 = vunpack.c.l.b16 %v38
  %v101 = vunpack.c.l.b16 %v39
  %v102 = vunpack.c.l.b16 %v40
  %v103 = vpack.c.b16 %v79, %v78
  %v104 = vpack.c.b16 %v81, %v80
  %v105 = vpack.c.b16 %v83, %v82
  %v106 = vpack.c.b16 %v85, %v84
  %v107 = vpack.c.b16 %v87, %v86
  %v108 = vpack.c.b16 %v89, %v88
  %v109 = vpack.c.b16 %v91, %v90
  %v110 = vpack.c.b16 %v93, %v92
  %v111 = vpack.c.b16 %v95, %v94
  %v112 = vpack.c.b16 %v97, %v96
  %v113 = vpack.c.b16 %v99, %v98
  %v114 = vpack.c.b16 %v101, %v100
  %v115 = vpack.c.b16 %v102, %v102
  %vm128 = vcmask 588800
  %v130 = vsel %vm128, %v51, 0
  %vm132 = vcmask 1043456
  %v134 = vsel %vm132, %v115, 0
  %136 = vmatprep.subr.bf16.mxu0 0
  %137 = vmatpush1.bf16.msra.mxu0 %v103
  %138 = vmatprep.subr.bf16.mxu0 0
  %139 = vmatpush1.bf16.msra.mxu0 %v104
  %140 = vmatprep.subr.bf16.mxu0 0
  %141 = vmatpush1.bf16.msra.mxu0 %v105
  %142 = vmatprep.subr.bf16.mxu0 0
  %143 = vmatpush1.bf16.msra.mxu0 %v106
  %144 = vmatprep.subr.bf16.mxu0 0
  %145 = vmatpush1.bf16.msra.mxu0 %v107
  %146 = vmatprep.subr.bf16.mxu0 0
  %147 = vmatpush1.bf16.msra.mxu0 %v108
  %148 = vmatprep.subr.bf16.mxu0 0
  %149 = vmatpush1.bf16.msra.mxu0 %v109
  %150 = vmatprep.subr.bf16.mxu0 0
  %151 = vmatpush1.bf16.msra.mxu0 %v110
  %152 = vmatprep.subr.bf16.mxu0 0
  %153 = vmatpush1.bf16.msra.mxu0 %v111
  %154 = vmatprep.subr.bf16.mxu0 0
  %155 = vmatpush1.bf16.msra.mxu0 %v112
  %156 = vmatprep.subr.bf16.mxu0 0
  %157 = vmatpush1.bf16.msra.mxu0 %v113
  %158 = vmatprep.subr.bf16.mxu0 0
  %159 = vmatpush1.bf16.msra.mxu0 %v114
  %160 = vmatprep.subr.bf16.mxu0 0
  %161 = vmatpush1.bf16.msra.mxu0 %v134
  %162 = vmatprep.subr.bf16.mxu0 0
  %163 = vmatpush1.bf16.msra.mxu0 0
  %164 = vmatprep.subr.bf16.mxu0 0
  %165 = vmatpush1.bf16.msra.mxu0 0
  %166 = vmatprep.subr.bf16.mxu0 0
  %167 = vmatpush1.bf16.msra.mxu0 0
  %168 = vmatprep.mubr.bf16.mxu0 %v130
  %169 = vmatmul.mubr.bf16.gmra.mrb[0].mxu0 %v50
  %v170 = vpop.f32.mrb[0].mxu0
  %v171 = vadd.f32 %v45, %v170
  %v172 = vpop.f32.mrb[0].mxu0
  %v173 = vpop.f32.mrb[0].mxu0
  %v174 = vpop.f32.mrb[0].mxu0
  %175 = vdwg.mxu0
  %vm176 = vcmp.gt.f32.partialorder %v171, 0.0
  %v177 = vmul.f32 %v171, 0.01
  %v178 = vsel %vm176, %v171, %v177
  %179 = vst [vmem:[%s3] sm:$0xff] %v178
  // Predicated region
  $region14: #{multi_branch_stem_m12x.16} parent=0 // pred_check
    _
  $region15: #{multi_branch_stem_m12x.16} parent=0 // pred_check_branch
    %181 = sbr.rel (0) target = $region17
  $region16: #{multi_branch_stem_m12x.16} parent=0 // pred_region
    _
  $region17: #{multi_branch_stem_m12x.16} parent=0 // pred_fallthru
    _
  // Predicated region
  $region18: #{multi_branch_stem_m12x.16} parent=0 // pred_check
    _
  $region19: #{multi_branch_stem_m12x.16} parent=0 // pred_check_branch
    %183 = sbr.rel (0) target = $region21
  $region20: #{multi_branch_stem_m12x.16} parent=0 // pred_region
    _
  $region21: #{multi_branch_stem_m12x.16} parent=0 // pred_fallthru
    _

// kernel: multi_branch_stem_m12x.17
$region0: #{multi_branch_stem_m12x.17}
  #allocation0 [shape = 'u32[]', space=smem, size = 0x4, offset = 0x4, fixed_abs, tag = 'smem constant byte address 0x4 - core index']
  #allocation1 [shape = 'u32[144,128]{1,0:T(1,128)}', space=vmem, size = 0x12000, scoped, tag = 'internal scratch']
  %s0 = inlined_call_operand.vmem [shape: bf16[8,64], index: 0, kind: input, shape index: {}]
  %s1 = inlined_call_operand.vmem [shape: bf16[64,128], index: 1, kind: input, shape index: {}]
  %s2 = inlined_call_operand.vmem [shape: f32[8,1], index: 2, kind: input, shape index: {}]
  %s3 = inlined_call_operand.vmem [shape: f32[8,128], index: 3, kind: output, shape index: {}]
  %s4 = sld [smem:[#allocation0]]
  $region22: #{multi_branch_stem_m12x.17} parent=0
    _
  %s6 = ssub.s32 1, %s4
  %s7 = scalar_select 0, %s6, %s4
  // Predicated region
  $region2: #{multi_branch_stem_m12x.17} parent=0 // pred_check
    _
  $region3: #{multi_branch_stem_m12x.17} parent=0 // pred_check_branch
    %9 = sbr.rel (0) target = $region5
  $region4: #{multi_branch_stem_m12x.17} parent=0 // pred_region
    _
  $region5: #{multi_branch_stem_m12x.17} parent=0 // pred_fallthru
    _
  // Predicated region
  $region6: #{multi_branch_stem_m12x.17} parent=0 // pred_check
    _
  $region7: #{multi_branch_stem_m12x.17} parent=0 // pred_check_branch
    %11 = sbr.rel (0) target = $region9
  $region8: #{multi_branch_stem_m12x.17} parent=0 // pred_region
    _
  $region9: #{multi_branch_stem_m12x.17} parent=0 // pred_fallthru
    _
  // Predicated region
  $region10: #{multi_branch_stem_m12x.17} parent=0 // pred_check
    _
  $region11: #{multi_branch_stem_m12x.17} parent=0 // pred_check_branch
    %13 = sbr.rel (0) target = $region13
  $region12: #{multi_branch_stem_m12x.17} parent=0 // pred_region
    _
  $region13: #{multi_branch_stem_m12x.17} parent=0 // pred_fallthru
    _
  %v15 = vld [vmem:[%s0] sm:$0xf]
  %v16 = vld [vmem:[%s1] sm:$0xf]
  %v17 = vld [vmem:[%s1 + $0x4] sm:$0xf]
  %v18 = vld [vmem:[%s1 + $0x8] sm:$0xf]
  %v19 = vld [vmem:[%s1 + $0xc] sm:$0xf]
  %v20 = vld [vmem:[%s1 + $0x10] sm:$0xf]
  %v21 = vld [vmem:[%s1 + $0x14] sm:$0xf]
  %v22 = vld [vmem:[%s1 + $0x18] sm:$0xf]
  %v23 = vld [vmem:[%s1 + $0x1c] sm:$0xf]
  %v24 = vld [vmem:[%s2] sm:$0xff]
  %26 = vset.pattern.permute.xlu0 0
  %27 = vperm.xlu0 %26, %v24
  %v28 = vpop.permute.xlu0 %27
  %v38 = vunpack.c.l.b16 %v16
  %v39 = vunpack.c.l.b16 %v17
  %v40 = vunpack.c.l.b16 %v18
  %v41 = vunpack.c.l.b16 %v19
  %v42 = vunpack.c.l.b16 %v20
  %v43 = vunpack.c.l.b16 %v21
  %v44 = vunpack.c.l.b16 %v22
  %v45 = vunpack.c.l.b16 %v23
  %v46 = vpack.c.b16 %v39, %v38
  %v47 = vpack.c.b16 %v41, %v40
  %v48 = vpack.c.b16 %v43, %v42
  %v49 = vpack.c.b16 %v45, %v44
  %vm54 = vcmask 523264
  %v56 = vsel %vm54, %v15, 0
  %58 = vmatprep.subr.bf16.mxu0 0
  %59 = vmatpush1.bf16.msra.mxu0 %v46
  %60 = vmatprep.subr.bf16.mxu0 0
  %61 = vmatpush1.bf16.msra.mxu0 %v47
  %62 = vmatprep.subr.bf16.mxu0 0
  %63 = vmatpush1.bf16.msra.mxu0 %v48
  %64 = vmatprep.subr.bf16.mxu0 0
  %65 = vmatpush1.bf16.msra.mxu0 %v49
  %66 = vmatprep.subr.bf16.mxu0 0
  %67 = vmatpush1.bf16.msra.mxu0 0
  %68 = vmatprep.subr.bf16.mxu0 0
  %69 = vmatpush1.bf16.msra.mxu0 0
  %70 = vmatprep.subr.bf16.mxu0 0
  %71 = vmatpush1.bf16.msra.mxu0 0
  %72 = vmatprep.subr.bf16.mxu0 0
  %73 = vmatpush1.bf16.msra.mxu0 0
  %74 = vmatprep.subr.bf16.mxu0 0
  %75 = vmatpush1.bf16.msra.mxu0 0
  %76 = vmatprep.subr.bf16.mxu0 0
  %77 = vmatpush1.bf16.msra.mxu0 0
  %78 = vmatprep.subr.bf16.mxu0 0
  %79 = vmatpush1.bf16.msra.mxu0 0
  %80 = vmatprep.subr.bf16.mxu0 0
  %81 = vmatpush1.bf16.msra.mxu0 0
  %82 = vmatprep.subr.bf16.mxu0 0
  %83 = vmatpush1.bf16.msra.mxu0 0
  %84 = vmatprep.subr.bf16.mxu0 0
  %85 = vmatpush1.bf16.msra.mxu0 0
  %86 = vmatprep.subr.bf16.mxu0 0
  %87 = vmatpush1.bf16.msra.mxu0 0
  %88 = vmatprep.subr.bf16.mxu0 0
  %89 = vmatpush1.bf16.msra.mxu0 0
  %90 = vmatprep.mubr.bf16.mxu0 0
  %91 = vmatmul.mubr.bf16.gmra.mrb[0].mxu0 %v56
  %v92 = vpop.f32.mrb[0].mxu0
  %v93 = vadd.f32 %v28, %v92
  %v94 = vpop.f32.mrb[0].mxu0
  %v95 = vpop.f32.mrb[0].mxu0
  %v96 = vpop.f32.mrb[0].mxu0
  %97 = vdwg.mxu0
  %vm98 = vcmp.gt.f32.partialorder %v93, 0.0
  %v99 = vmul.f32 %v93, 0.01
  %v100 = vsel %vm98, %v93, %v99
  %101 = vst [vmem:[%s3] sm:$0xff] %v100
  // Predicated region
  $region14: #{multi_branch_stem_m12x.17} parent=0 // pred_check
    _
  $region15: #{multi_branch_stem_m12x.17} parent=0 // pred_check_branch
    %103 = sbr.rel (0) target = $region17
  $region16: #{multi_branch_stem_m12x.17} parent=0 // pred_region
    _
  $region17: #{multi_branch_stem_m12x.17} parent=0 // pred_fallthru
    _
  // Predicated region
  $region18: #{multi_branch_stem_m12x.17} parent=0 // pred_check
    _
  $region19: #{multi_branch_stem_m12x.17} parent=0 // pred_check_branch
    %105 = sbr.rel (0) target = $region21
  $region20: #{multi_branch_stem_m12x.17} parent=0 // pred_region
    _
  $region21: #{multi_branch_stem_m12x.17} parent=0 // pred_fallthru
    _

// kernel: multi_branch_stem_m12x.18
$region0: #{multi_branch_stem_m12x.18}
  #allocation0 [shape = 'u32[]', space=smem, size = 0x4, offset = 0x4, fixed_abs, tag = 'smem constant byte address 0x4 - core index']
  #allocation1 [shape = 'u32[144,128]{1,0:T(1,128)}', space=vmem, size = 0x12000, scoped, tag = 'internal scratch']
  %s0 = inlined_call_operand.vmem [shape: bf16[8,40], index: 0, kind: input, shape index: {}]
  %s1 = inlined_call_operand.vmem [shape: bf16[40,128], index: 1, kind: input, shape index: {}]
  %s2 = inlined_call_operand.vmem [shape: f32[8,1], index: 2, kind: input, shape index: {}]
  %s3 = inlined_call_operand.vmem [shape: f32[8,128], index: 3, kind: output, shape index: {}]
  %s4 = sld [smem:[#allocation0]]
  $region22: #{multi_branch_stem_m12x.18} parent=0
    _
  %s6 = ssub.s32 1, %s4
  %s7 = scalar_select 0, %s6, %s4
  // Predicated region
  $region2: #{multi_branch_stem_m12x.18} parent=0 // pred_check
    _
  $region3: #{multi_branch_stem_m12x.18} parent=0 // pred_check_branch
    %9 = sbr.rel (0) target = $region5
  $region4: #{multi_branch_stem_m12x.18} parent=0 // pred_region
    _
  $region5: #{multi_branch_stem_m12x.18} parent=0 // pred_fallthru
    _
  // Predicated region
  $region6: #{multi_branch_stem_m12x.18} parent=0 // pred_check
    _
  $region7: #{multi_branch_stem_m12x.18} parent=0 // pred_check_branch
    %11 = sbr.rel (0) target = $region9
  $region8: #{multi_branch_stem_m12x.18} parent=0 // pred_region
    _
  $region9: #{multi_branch_stem_m12x.18} parent=0 // pred_fallthru
    _
  // Predicated region
  $region10: #{multi_branch_stem_m12x.18} parent=0 // pred_check
    _
  $region11: #{multi_branch_stem_m12x.18} parent=0 // pred_check_branch
    %13 = sbr.rel (0) target = $region13
  $region12: #{multi_branch_stem_m12x.18} parent=0 // pred_region
    _
  $region13: #{multi_branch_stem_m12x.18} parent=0 // pred_fallthru
    _
  %v15 = vld [vmem:[%s0] sm:$0xf]
  %v16 = vld [vmem:[%s1] sm:$0xf]
  %v17 = vld [vmem:[%s1 + $0x4] sm:$0xf]
  %v18 = vld [vmem:[%s1 + $0x8] sm:$0xf]
  %v19 = vld [vmem:[%s1 + $0xc] sm:$0xf]
  %v20 = vld [vmem:[%s1 + $0x10] sm:$0xf]
  %v21 = vld [vmem:[%s2] sm:$0xff]
  %23 = vset.pattern.permute.xlu0 0
  %24 = vperm.xlu0 %23, %v21
  %v25 = vpop.permute.xlu0 %24
  %v32 = vunpack.c.l.b16 %v16
  %v33 = vunpack.c.l.b16 %v17
  %v34 = vunpack.c.l.b16 %v18
  %v35 = vunpack.c.l.b16 %v19
  %v36 = vunpack.c.l.b16 %v20
  %v37 = vpack.c.b16 %v33, %v32
  %v38 = vpack.c.b16 %v35, %v34
  %v39 = vpack.c.b16 %v36, %v36
  %vm42 = vcmask 326656
  %v44 = vsel %vm42, %v15, 0
  %vm46 = vcmask 1043456
  %v48 = vsel %vm46, %v39, 0
  %50 = vmatprep.subr.bf16.mxu0 0
  %51 = vmatpush1.bf16.msra.mxu0 %v37
  %52 = vmatprep.subr.bf16.mxu0 0
  %53 = vmatpush1.bf16.msra.mxu0 %v38
  %54 = vmatprep.subr.bf16.mxu0 0
  %55 = vmatpush1.bf16.msra.mxu0 %v48
  %56 = vmatprep.subr.bf16.mxu0 0
  %57 = vmatpush1.bf16.msra.mxu0 0
  %58 = vmatprep.subr.bf16.mxu0 0
  %59 = vmatpush1.bf16.msra.mxu0 0
  %60 = vmatprep.subr.bf16.mxu0 0
  %61 = vmatpush1.bf16.msra.mxu0 0
  %62 = vmatprep.subr.bf16.mxu0 0
  %63 = vmatpush1.bf16.msra.mxu0 0
  %64 = vmatprep.subr.bf16.mxu0 0
  %65 = vmatpush1.bf16.msra.mxu0 0
  %66 = vmatprep.subr.bf16.mxu0 0
  %67 = vmatpush1.bf16.msra.mxu0 0
  %68 = vmatprep.subr.bf16.mxu0 0
  %69 = vmatpush1.bf16.msra.mxu0 0
  %70 = vmatprep.subr.bf16.mxu0 0
  %71 = vmatpush1.bf16.msra.mxu0 0
  %72 = vmatprep.subr.bf16.mxu0 0
  %73 = vmatpush1.bf16.msra.mxu0 0
  %74 = vmatprep.subr.bf16.mxu0 0
  %75 = vmatpush1.bf16.msra.mxu0 0
  %76 = vmatprep.subr.bf16.mxu0 0
  %77 = vmatpush1.bf16.msra.mxu0 0
  %78 = vmatprep.subr.bf16.mxu0 0
  %79 = vmatpush1.bf16.msra.mxu0 0
  %80 = vmatprep.subr.bf16.mxu0 0
  %81 = vmatpush1.bf16.msra.mxu0 0
  %82 = vmatprep.mubr.bf16.mxu0 0
  %83 = vmatmul.mubr.bf16.gmra.mrb[0].mxu0 %v44
  %v84 = vpop.f32.mrb[0].mxu0
  %v85 = vadd.f32 %v25, %v84
  %v86 = vpop.f32.mrb[0].mxu0
  %v87 = vpop.f32.mrb[0].mxu0
  %v88 = vpop.f32.mrb[0].mxu0
  %89 = vdwg.mxu0
  %vm90 = vcmp.gt.f32.partialorder %v85, 0.0
  %v91 = vmul.f32 %v85, 0.01
  %v92 = vsel %vm90, %v85, %v91
  %93 = vst [vmem:[%s3] sm:$0xff] %v92
  // Predicated region
  $region14: #{multi_branch_stem_m12x.18} parent=0 // pred_check
    _
  $region15: #{multi_branch_stem_m12x.18} parent=0 // pred_check_branch
    %95 = sbr.rel (0) target = $region17
  $region16: #{multi_branch_stem_m12x.18} parent=0 // pred_region
    _
  $region17: #{multi_branch_stem_m12x.18} parent=0 // pred_fallthru
    _
  // Predicated region
  $region18: #{multi_branch_stem_m12x.18} parent=0 // pred_check
    _
  $region19: #{multi_branch_stem_m12x.18} parent=0 // pred_check_branch
    %97 = sbr.rel (0) target = $region21
  $region20: #{multi_branch_stem_m12x.18} parent=0 // pred_region
    _
  $region21: #{multi_branch_stem_m12x.18} parent=0 // pred_fallthru
    _

// kernel: multi_branch_stem_m12x.19
$region0: #{multi_branch_stem_m12x.19}
  #allocation0 [shape = 'u32[]', space=smem, size = 0x4, offset = 0x4, fixed_abs, tag = 'smem constant byte address 0x4 - core index']
  #allocation1 [shape = 'u32[144,128]{1,0:T(1,128)}', space=vmem, size = 0x12000, scoped, tag = 'internal scratch']
  %s0 = inlined_call_operand.vmem [shape: bf16[16,144], index: 0, kind: input, shape index: {}]
  %s1 = inlined_call_operand.vmem [shape: bf16[144,128], index: 1, kind: input, shape index: {}]
  %s2 = inlined_call_operand.vmem [shape: f32[16,1], index: 2, kind: input, shape index: {}]
  %s3 = inlined_call_operand.vmem [shape: f32[16,128], index: 3, kind: output, shape index: {}]
  %s4 = sld [smem:[#allocation0]]
  $region22: #{multi_branch_stem_m12x.19} parent=0
    _
  %s6 = ssub.s32 1, %s4
  %s7 = scalar_select 0, %s6, %s4
  // Predicated region
  $region2: #{multi_branch_stem_m12x.19} parent=0 // pred_check
    _
  $region3: #{multi_branch_stem_m12x.19} parent=0 // pred_check_branch
    %9 = sbr.rel (0) target = $region5
  $region4: #{multi_branch_stem_m12x.19} parent=0 // pred_region
    _
  $region5: #{multi_branch_stem_m12x.19} parent=0 // pred_fallthru
    _
  // Predicated region
  $region6: #{multi_branch_stem_m12x.19} parent=0 // pred_check
    _
  $region7: #{multi_branch_stem_m12x.19} parent=0 // pred_check_branch
    %11 = sbr.rel (0) target = $region9
  $region8: #{multi_branch_stem_m12x.19} parent=0 // pred_region
    _
  $region9: #{multi_branch_stem_m12x.19} parent=0 // pred_fallthru
    _
  // Predicated region
  $region10: #{multi_branch_stem_m12x.19} parent=0 // pred_check
    _
  $region11: #{multi_branch_stem_m12x.19} parent=0 // pred_check_branch
    %13 = sbr.rel (0) target = $region13
  $region12: #{multi_branch_stem_m12x.19} parent=0 // pred_region
    _
  $region13: #{multi_branch_stem_m12x.19} parent=0 // pred_fallthru
    _
  %v15 = vld [vmem:[%s0] sm:$0xff]
  %v16 = vld [vmem:[%s0 + $0x8] sm:$0xff]
  %v17 = vld [vmem:[%s1] sm:$0xf]
  %v18 = vld [vmem:[%s1 + $0x4] sm:$0xf]
  %v19 = vld [vmem:[%s1 + $0x8] sm:$0xf]
  %v20 = vld [vmem:[%s1 + $0xc] sm:$0xf]
  %v21 = vld [vmem:[%s1 + $0x10] sm:$0xf]
  %v22 = vld [vmem:[%s1 + $0x14] sm:$0xf]
  %v23 = vld [vmem:[%s1 + $0x18] sm:$0xf]
  %v24 = vld [vmem:[%s1 + $0x1c] sm:$0xf]
  %v25 = vld [vmem:[%s1 + $0x20] sm:$0xf]
  %v26 = vld [vmem:[%s1 + $0x24] sm:$0xf]
  %v27 = vld [vmem:[%s1 + $0x28] sm:$0xf]
  %v28 = vld [vmem:[%s1 + $0x2c] sm:$0xf]
  %v29 = vld [vmem:[%s1 + $0x30] sm:$0xf]
  %v30 = vld [vmem:[%s1 + $0x34] sm:$0xf]
  %v31 = vld [vmem:[%s1 + $0x38] sm:$0xf]
  %v32 = vld [vmem:[%s1 + $0x3c] sm:$0xf]
  %v33 = vld [vmem:[%s1 + $0x40] sm:$0xf]
  %v34 = vld [vmem:[%s1 + $0x44] sm:$0xf]
  %v35 = vld [vmem:[%s2] sm:$0xff]
  %v36 = vld [vmem:[%s2 + $0x8] sm:$0xff]
  %38 = vset.pattern.permute.xlu0 0
  %39 = vperm.xlu0 %38, %v35
  %v40 = vpop.permute.xlu0 %39
  %43 = vset.pattern.permute.xlu0 0
  %44 = vperm.xlu0 %43, %v36
  %v45 = vpop.permute.xlu0 %44
  %v49 = vunpack.c.l.b16 %v15
  %v50 = vunpack.c.h.b16 %v15
  %v51 = vunpack.c.l.b16 %v16
  %v52 = vunpack.c.h.b16 %v16
  %v53 = vpack.c.b16 %v51, %v49
  %v54 = vpack.c.b16 %v52, %v50
  %v74 = vunpack.c.l.b16 %v17
  %v75 = vunpack.c.l.b16 %v18
  %v76 = vunpack.c.l.b16 %v19
  %v77 = vunpack.c.l.b16 %v20
  %v78 = vunpack.c.l.b16 %v21
  %v79 = vunpack.c.l.b16 %v22
  %v80 = vunpack.c.l.b16 %v23
  %v81 = vunpack.c.l.b16 %v24
  %v82 = vunpack.c.l.b16 %v25
  %v83 = vunpack.c.l.b16 %v26
  %v84 = vunpack.c.l.b16 %v27
  %v85 = vunpack.c.l.b16 %v28
  %v86 = vunpack.c.l.b16 %v29
  %v87 = vunpack.c.l.b16 %v30
  %v88 = vunpack.c.l.b16 %v31
  %v89 = vunpack.c.l.b16 %v32
  %v90 = vunpack.c.l.b16 %v33
  %v91 = vunpack.c.l.b16 %v34
  %v92 = vpack.c.b16 %v75, %v74
  %v93 = vpack.c.b16 %v77, %v76
  %v94 = vpack.c.b16 %v79, %v78
  %v95 = vpack.c.b16 %v81, %v80
  %v96 = vpack.c.b16 %v83, %v82
  %v97 = vpack.c.b16 %v85, %v84
  %v98 = vpack.c.b16 %v87, %v86
  %v99 = vpack.c.b16 %v89, %v88
  %v100 = vpack.c.b16 %v91, %v90
  %vm110 = vcmask 130048
  %v112 = vsel %vm110, %v54, 0
  %114 = vmatprep.subr.bf16.mxu0 0
  %115 = vmatpush1.bf16.msra.mxu0 %v92
  %116 = vmatprep.subr.bf16.mxu0 0
  %117 = vmatpush1.bf16.msra.mxu0 %v93
  %118 = vmatprep.subr.bf16.mxu0 0
  %119 = vmatpush1.bf16.msra.mxu0 %v94
  %120 = vmatprep.subr.bf16.mxu0 0
  %121 = vmatpush1.bf16.msra.mxu0 %v95
  %122 = vmatprep.subr.bf16.mxu0 0
  %123 = vmatpush1.bf16.msra.mxu0 %v96
  %124 = vmatprep.subr.bf16.mxu0 0
  %125 = vmatpush1.bf16.msra.mxu0 %v97
  %126 = vmatprep.subr.bf16.mxu0 0
  %127 = vmatpush1.bf16.msra.mxu0 %v98
  %128 = vmatprep.subr.bf16.mxu0 0
  %129 = vmatpush1.bf16.msra.mxu0 %v99
  %130 = vmatprep.subr.bf16.mxu0 0
  %131 = vmatpush1.bf16.msra.mxu0 %v100
  %132 = vmatprep.subr.bf16.mxu0 0
  %133 = vmatpush1.bf16.msra.mxu0 0
  %134 = vmatprep.subr.bf16.mxu0 0
  %135 = vmatpush1.bf16.msra.mxu0 0
  %136 = vmatprep.subr.bf16.mxu0 0
  %137 = vmatpush1.bf16.msra.mxu0 0
  %138 = vmatprep.subr.bf16.mxu0 0
  %139 = vmatpush1.bf16.msra.mxu0 0
  %140 = vmatprep.subr.bf16.mxu0 0
  %141 = vmatpush1.bf16.msra.mxu0 0
  %142 = vmatprep.subr.bf16.mxu0 0
  %143 = vmatpush1.bf16.msra.mxu0 0
  %144 = vmatprep.subr.bf16.mxu0 0
  %145 = vmatpush1.bf16.msra.mxu0 0
  %146 = vmatprep.mubr.bf16.mxu0 %v112
  %147 = vmatmul.mubr.bf16.gmra.mrb[0].mxu0 %v53
  %v148 = vpop.f32.mrb[0].mxu0
  %v149 = vadd.f32 %v40, %v148
  %v150 = vpop.f32.mrb[0].mxu0
  %v151 = vpop.f32.mrb[0].mxu0
  %v152 = vadd.f32 %v45, %v151
  %v153 = vpop.f32.mrb[0].mxu0
  %154 = vdwg.mxu0
  %vm155 = vcmp.gt.f32.partialorder %v149, 0.0
  %vm156 = vcmp.gt.f32.partialorder %v152, 0.0
  %v157 = vmul.f32 %v149, 0.01
  %v158 = vmul.f32 %v152, 0.01
  %v159 = vsel %vm155, %v149, %v157
  %v160 = vsel %vm156, %v152, %v158
  %161 = vst [vmem:[%s3] sm:$0xff] %v159
  %162 = vst [vmem:[%s3 + $0x8] sm:$0xff] %v160
  // Predicated region
  $region14: #{multi_branch_stem_m12x.19} parent=0 // pred_check
    _
  $region15: #{multi_branch_stem_m12x.19} parent=0 // pred_check_branch
    %164 = sbr.rel (0) target = $region17
  $region16: #{multi_branch_stem_m12x.19} parent=0 // pred_region
    _
  $region17: #{multi_branch_stem_m12x.19} parent=0 // pred_fallthru
    _
  // Predicated region
  $region18: #{multi_branch_stem_m12x.19} parent=0 // pred_check
    _
  $region19: #{multi_branch_stem_m12x.19} parent=0 // pred_check_branch
    %166 = sbr.rel (0) target = $region21
  $region20: #{multi_branch_stem_m12x.19} parent=0 // pred_region
    _
  $region21: #{multi_branch_stem_m12x.19} parent=0 // pred_fallthru
    _

</llo_original>
